<compile_context>
chip_gen: v7x
topology: tpu7x:2x2x1
jax: 0.10.0
libtpu: 0.0.40
codegen_flags: <defaults>
</compile_context>

<pallas_src>
import math
import functools

import jax
import jax.numpy as jnp
from jax import lax
from jax.experimental import pallas as pl
from jax.experimental.pallas import tpu as pltpu


def _round_up(x, m):
    return ((x + m - 1) // m) * m


# --------------------------------------------------------------------------
# Fused kernel: relu -> hoisted input projections -> GRU recurrence
#               -> Linear + LogSoftmax on output[0]
# --------------------------------------------------------------------------
def _decoder_kernel(x_ref, h0_ref, wih_t_ref, whh_t_ref, bih_ref, bhh_ref,
                    wout_t_ref, bout_ref, logp_ref, hN_ref, gi_ref, *,
                    seq_len, hidden_pad, vocab_size):
    S = seq_len
    Hp = hidden_pad
    Bp = h0_ref.shape[0]

    # ---- hoisted input-side gate projections for ALL timesteps (one MXU pass) ----
    x = jnp.maximum(x_ref[...], 0.0)                                 # fused F.relu, f32
    gi_all = (jnp.dot(x.astype(jnp.bfloat16), wih_t_ref[...],
                      preferred_element_type=jnp.float32)
              + bih_ref[...])                                        # (S*Bp, 3Hp) f32
    # Stash per-timestep gate blocks into a 3-D scratch; each slice is a full
    # (8, 3Hp) sublane tile, so these are plain vreg-aligned stores (no repack).
    for t in range(S):
        gi_ref[t] = gi_all[t * Bp:(t + 1) * Bp, :]

    def gru_step(gi, h):
        # PyTorch GRU gate order (r, z, n); gate blocks are Hp-lane aligned.
        gh = (jnp.dot(h.astype(jnp.bfloat16), whh_t_ref[...],
                      preferred_element_type=jnp.float32)
              + bhh_ref[...])                                        # (Bp, 3Hp) f32
        r = jax.nn.sigmoid(gi[:, :Hp] + gh[:, :Hp])
        z = jax.nn.sigmoid(gi[:, Hp:2 * Hp] + gh[:, Hp:2 * Hp])
        n = jnp.tanh(gi[:, 2 * Hp:3 * Hp] + r * gh[:, 2 * Hp:3 * Hp])
        return (1.0 - z) * n + z * h

    h0 = h0_ref[...]                                                 # (Bp, Hp) f32
    out0 = gru_step(gi_ref[0], h0) if S > 0 else h0                  # == GRU output[0]

    # ---- output projection + log_softmax(dim=1), issued right after step 0 so the
    #      MXU/EUP work hides under the remaining serial recurrence ----------------
    logits = (jnp.dot(out0.astype(jnp.bfloat16), wout_t_ref[...],
                      preferred_element_type=jnp.float32)
              + bout_ref[...])                                       # (Bp, Vp) f32
    v_pad = logits.shape[-1]
    valid = lax.broadcasted_iota(jnp.int32, (1, v_pad), 1) < vocab_size
    logits = jnp.where(valid, logits, jnp.float32(-1e30))            # neutralize pad lanes
    m = jnp.max(logits, axis=1, keepdims=True)
    s = logits - m
    denom = jnp.sum(jnp.where(valid, jnp.exp(s), 0.0), axis=1, keepdims=True)
    logp_ref[...] = s - jnp.log(denom)                               # lane/sublane-dense store

    # ---- remaining serial steps 1..S-1; only h is carried -------------------------
    def body(t, h):
        return gru_step(gi_ref[t], h)                                # leading-axis view

    if S > 1:
        hN = lax.fori_loop(1, S, body, out0, unroll=True)
    else:
        hN = out0
    hN_ref[...] = hN


# --------------------------------------------------------------------------
# One-time parameter preparation (outside the per-token call):
# pad to (8,128) tiles, fuse + transpose gate weights per gate block, cast bf16.
# --------------------------------------------------------------------------
def prepare_params(params, *, hidden_size, output_size):
    H, V = hidden_size, output_size
    Hp = _round_up(H, 128)
    Vp = _round_up(V, 128)

    def pad_gate_weight_T(w):                 # (3H, H) -> (Hp, 3Hp) transposed, per-gate pad
        wt = jnp.zeros((Hp, 3 * Hp), jnp.float32)
        for g in range(3):
            wt = wt.at[:H, g * Hp:g * Hp + H].set(w[g * H:(g + 1) * H, :].T)
        return wt.astype(jnp.bfloat16)

    def pad_gate_bias(b):                     # (3H,) -> (1, 3Hp), per-gate pad
        bb = jnp.zeros((1, 3 * Hp), jnp.float32)
        for g in range(3):
            bb = bb.at[0, g * Hp:g * Hp + H].set(b[g * H:(g + 1) * H])
        return bb

    wout_t = (jnp.zeros((Hp, Vp), jnp.float32)
                 .at[:H, :V].set(params["w_out"].T).astype(jnp.bfloat16))
    bout = jnp.zeros((1, Vp), jnp.float32).at[0, :V].set(params["b_out"])

    return {
        "wih_t": pad_gate_weight_T(params["w_ih"]),
        "whh_t": pad_gate_weight_T(params["w_hh"]),
        "bih": pad_gate_bias(params["b_ih"]),
        "bhh": pad_gate_bias(params["b_hh"]),
        "wout_t": wout_t,
        "bout": bout,
    }


# --------------------------------------------------------------------------
# Wrapper: layout plumbing + pallas_call
# --------------------------------------------------------------------------
@functools.partial(jax.jit, static_argnames=("output_size",))
def decoder_rnn_forward(inp, hidden, prep, *, output_size):
    """inp: (S, B, H), hidden: (1, B, H). Returns (log_probs (B, V), hidden (1, B, H))."""
    S, B, H = inp.shape
    V = output_size
    Hp = prep["whh_t"].shape[0]
    Vp = prep["wout_t"].shape[1]
    Bp = _round_up(B, 8)                      # sublane-aligned batch

    # zero-padded, tile-aligned activations (padded lanes/rows stay inert in the GRU)
    x = (jnp.zeros((S, Bp, Hp), jnp.float32)
            .at[:, :B, :H].set(inp.astype(jnp.float32))).reshape(S * Bp, Hp)
    h0 = (jnp.zeros((Bp, Hp), jnp.float32)
             .at[:B, :H].set(hidden.reshape(B, H).astype(jnp.float32)))

    kernel = functools.partial(_decoder_kernel, seq_len=S, hidden_pad=Hp, vocab_size=V)

    def full_spec(shape):
        n = len(shape)
        return pl.BlockSpec(shape, lambda n=n: (0,) * n)

    logp_pad, h_final = pl.pallas_call(
        kernel,
        out_shape=(jax.ShapeDtypeStruct((Bp, Vp), jnp.float32),
                   jax.ShapeDtypeStruct((Bp, Hp), jnp.float32)),
        in_specs=[
            full_spec((S * Bp, Hp)),          # x (relu'd in kernel), all timesteps
            full_spec((Bp, Hp)),              # h0 (aliased to the hidden output)
            full_spec((Hp, 3 * Hp)),          # W_ih^T (bf16, gate-fused r|z|n, padded)
            full_spec((Hp, 3 * Hp)),          # W_hh^T (bf16, padded)
            full_spec((1, 3 * Hp)),           # b_ih (f32, padded)
            full_spec((1, 3 * Hp)),           # b_hh (f32, padded)
            full_spec((Hp, Vp)),              # W_out^T (bf16, lane-padded)
            full_spec((1, Vp)),               # b_out (f32, lane-padded)
        ],
        out_specs=(full_spec((Bp, Vp)),       # log-probs (lane/sublane-dense)
                   full_spec((Bp, Hp))),      # final hidden
        scratch_shapes=[pltpu.VMEM((S, Bp, 3 * Hp), jnp.float32)],   # hoisted gate pre-acts
        input_output_aliases={1: 1},          # h0 buffer reused for h_final (decode loops)
        compiler_params=pltpu.CompilerParams(vmem_limit_bytes=48 * 1024 * 1024),
    )(x, h0, prep["wih_t"], prep["whh_t"], prep["bih"], prep["bhh"],
      prep["wout_t"], prep["bout"])

    return logp_pad[:B, :V], h_final[:B, :H].reshape(1, B, H)


# --------------------------------------------------------------------------
# Pure-JAX f32 reference (same math) for a sanity check.
# --------------------------------------------------------------------------
def reference_forward(inp, hidden, params):
    H = hidden.shape[-1]
    w_ih, w_hh, b_ih, b_hh = params["w_ih"], params["w_hh"], params["b_ih"], params["b_hh"]
    x = jnp.maximum(inp, 0.0)
    h = hidden[0]
    outs = []
    for t in range(x.shape[0]):
        gi = x[t] @ w_ih.T + b_ih
        gh = h @ w_hh.T + b_hh
        i_r, i_z, i_n = gi[:, :H], gi[:, H:2 * H], gi[:, 2 * H:]
        h_r, h_z, h_n = gh[:, :H], gh[:, H:2 * H], gh[:, 2 * H:]
        r = jax.nn.sigmoid(i_r + h_r)
        z = jax.nn.sigmoid(i_z + h_z)
        n = jnp.tanh(i_n + r * h_n)
        h = (1.0 - z) * n + z * h
        outs.append(h)
    out0 = outs[0]
    logits = out0 @ params["w_out"].T + params["b_out"]
    logp = logits - jax.scipy.special.logsumexp(logits, axis=1, keepdims=True)
    return logp, h[None]


if __name__ == "__main__":
    S, B, H, V = 8, 2, 32, 64   # seq, batch, hidden_size, output_size

    key = jax.random.PRNGKey(0)
    ks = jax.random.split(key, 8)
    k_gru = 1.0 / math.sqrt(H)   # PyTorch default init scale for GRU and Linear(H, V)

    params = {
        "w_ih": jax.random.uniform(ks[0], (3 * H, H), jnp.float32, -k_gru, k_gru),
        "w_hh": jax.random.uniform(ks[1], (3 * H, H), jnp.float32, -k_gru, k_gru),
        "b_ih": jax.random.uniform(ks[2], (3 * H,), jnp.float32, -k_gru, k_gru),
        "b_hh": jax.random.uniform(ks[3], (3 * H,), jnp.float32, -k_gru, k_gru),
        "w_out": jax.random.uniform(ks[4], (V, H), jnp.float32, -k_gru, k_gru),
        "b_out": jax.random.uniform(ks[5], (V,), jnp.float32, -k_gru, k_gru),
    }

    inp = jax.random.normal(ks[6], (S, B, H), jnp.float32)
    hidden = jnp.zeros((1, B, H), jnp.float32)   # DecoderRNN.initHidden (generalized to batch B)

    prep = prepare_params(params, hidden_size=H, output_size=V)   # one-time layout prep
    log_probs, h_out = decoder_rnn_forward(inp, hidden, prep, output_size=V)
    jax.block_until_ready((log_probs, h_out))

    ref_lp, ref_h = reference_forward(inp, hidden, params)
    assert log_probs.shape == (B, V) and h_out.shape == (1, B, H)
    # bf16 matmul operands (f32 accumulation) -> slightly looser tolerance than pure f32.
    assert jnp.allclose(log_probs, ref_lp, atol=5e-2, rtol=5e-2), \
        float(jnp.max(jnp.abs(log_probs - ref_lp)))
    assert jnp.allclose(h_out, ref_h, atol=5e-2, rtol=5e-2), \
        float(jnp.max(jnp.abs(h_out - ref_h)))

    print("KERNEL_OK")
</pallas_src>

<mosaic_0001>
module attributes {stable_mosaic.version = 11 : i64} {
  func.func @_decoder_kernel(%arg0: memref<64x128xf32, #tpu.memory_space<vmem>>, %arg1: memref<8x128xf32, #tpu.memory_space<vmem>>, %arg2: memref<128x384xbf16, #tpu.memory_space<vmem>>, %arg3: memref<128x384xbf16, #tpu.memory_space<vmem>>, %arg4: memref<1x384xf32, #tpu.memory_space<vmem>>, %arg5: memref<1x384xf32, #tpu.memory_space<vmem>>, %arg6: memref<128x128xbf16, #tpu.memory_space<vmem>>, %arg7: memref<1x128xf32, #tpu.memory_space<vmem>>, %arg8: memref<8x128xf32, #tpu.memory_space<vmem>>, %arg9: memref<8x128xf32, #tpu.memory_space<vmem>>, %arg10: memref<8x8x384xf32, #tpu.memory_space<vmem>>) attributes {dimension_semantics = [], scalar_prefetch = 0 : i64, scratch_operands = 1 : i64, tpu.core_type = #tpu.core_type<tc>} {
    %c0 = arith.constant 0 : index
    %c0_0 = arith.constant 0 : index
    %0 = vector.load %arg0[%c0, %c0_0] : memref<64x128xf32, #tpu.memory_space<vmem>>, vector<64x128xf32>
    %cst = arith.constant 0.000000e+00 : f32
    %1 = vector.broadcast %cst : f32 to vector<64x128xf32>
    %2 = arith.maximumf %0, %1 : vector<64x128xf32>
    %3 = arith.truncf %2 : vector<64x128xf32> to vector<64x128xbf16>
    %c0_1 = arith.constant 0 : index
    %c0_2 = arith.constant 0 : index
    %4 = vector.load %arg2[%c0_1, %c0_2] : memref<128x384xbf16, #tpu.memory_space<vmem>>, vector<128x384xbf16>
    %cst_3 = arith.constant dense<0.000000e+00> : vector<64x384xf32>
    %5 = tpu.matmul %3, %4, %cst_3 {dimension_numbers = #tpu.dot_dimension_numbers<[1], [0], [0], [1], [0, 0, 1, 1], [], []>} : vector<64x128xbf16>, vector<128x384xbf16>, vector<64x384xf32> -> vector<64x384xf32>
    %c0_4 = arith.constant 0 : index
    %c0_5 = arith.constant 0 : index
    %6 = vector.load %arg4[%c0_4, %c0_5] : memref<1x384xf32, #tpu.memory_space<vmem>>, vector<1x384xf32>
    %7 = vector.broadcast %6 : vector<1x384xf32> to vector<64x384xf32>
    %8 = arith.addf %5, %7 : vector<64x384xf32>
    %9 = vector.extract_strided_slice %8 {offsets = [0, 0], sizes = [8, 384], strides = [1, 1]} : vector<64x384xf32> to vector<8x384xf32>
    %c0_6 = arith.constant 0 : index
    %c0_7 = arith.constant 0 : index
    %c0_8 = arith.constant 0 : index
    %10 = vector.load %arg10[%c0_6, %c0_7, %c0_8] : memref<8x8x384xf32, #tpu.memory_space<vmem>>, vector<1x8x384xf32>
    %11 = vector.shape_cast %10 : vector<1x8x384xf32> to vector<8x384xf32>
    %12 = vector.shape_cast %9 : vector<8x384xf32> to vector<1x8x384xf32>
    tpu.vector_store %arg10[%c0_6, %c0_7, %c0_8], %12 {strides = array<i32>} : memref<8x8x384xf32, #tpu.memory_space<vmem>>, vector<1x8x384xf32>,
    %13 = vector.extract_strided_slice %8 {offsets = [8, 0], sizes = [8, 384], strides = [1, 1]} : vector<64x384xf32> to vector<8x384xf32>
    %c1 = arith.constant 1 : index
    %c0_9 = arith.constant 0 : index
    %c0_10 = arith.constant 0 : index
    %14 = vector.load %arg10[%c1, %c0_9, %c0_10] : memref<8x8x384xf32, #tpu.memory_space<vmem>>, vector<1x8x384xf32>
    %15 = vector.shape_cast %14 : vector<1x8x384xf32> to vector<8x384xf32>
    %16 = vector.shape_cast %13 : vector<8x384xf32> to vector<1x8x384xf32>
    tpu.vector_store %arg10[%c1, %c0_9, %c0_10], %16 {strides = array<i32>} : memref<8x8x384xf32, #tpu.memory_space<vmem>>, vector<1x8x384xf32>,
    %17 = vector.extract_strided_slice %8 {offsets = [16, 0], sizes = [8, 384], strides = [1, 1]} : vector<64x384xf32> to vector<8x384xf32>
    %c2 = arith.constant 2 : index
    %c0_11 = arith.constant 0 : index
    %c0_12 = arith.constant 0 : index
    %18 = vector.load %arg10[%c2, %c0_11, %c0_12] : memref<8x8x384xf32, #tpu.memory_space<vmem>>, vector<1x8x384xf32>
    %19 = vector.shape_cast %18 : vector<1x8x384xf32> to vector<8x384xf32>
    %20 = vector.shape_cast %17 : vector<8x384xf32> to vector<1x8x384xf32>
    tpu.vector_store %arg10[%c2, %c0_11, %c0_12], %20 {strides = array<i32>} : memref<8x8x384xf32, #tpu.memory_space<vmem>>, vector<1x8x384xf32>,
    %21 = vector.extract_strided_slice %8 {offsets = [24, 0], sizes = [8, 384], strides = [1, 1]} : vector<64x384xf32> to vector<8x384xf32>
    %c3 = arith.constant 3 : index
    %c0_13 = arith.constant 0 : index
    %c0_14 = arith.constant 0 : index
    %22 = vector.load %arg10[%c3, %c0_13, %c0_14] : memref<8x8x384xf32, #tpu.memory_space<vmem>>, vector<1x8x384xf32>
    %23 = vector.shape_cast %22 : vector<1x8x384xf32> to vector<8x384xf32>
    %24 = vector.shape_cast %21 : vector<8x384xf32> to vector<1x8x384xf32>
    tpu.vector_store %arg10[%c3, %c0_13, %c0_14], %24 {strides = array<i32>} : memref<8x8x384xf32, #tpu.memory_space<vmem>>, vector<1x8x384xf32>,
    %25 = vector.extract_strided_slice %8 {offsets = [32, 0], sizes = [8, 384], strides = [1, 1]} : vector<64x384xf32> to vector<8x384xf32>
    %c4 = arith.constant 4 : index
    %c0_15 = arith.constant 0 : index
    %c0_16 = arith.constant 0 : index
    %26 = vector.load %arg10[%c4, %c0_15, %c0_16] : memref<8x8x384xf32, #tpu.memory_space<vmem>>, vector<1x8x384xf32>
    %27 = vector.shape_cast %26 : vector<1x8x384xf32> to vector<8x384xf32>
    %28 = vector.shape_cast %25 : vector<8x384xf32> to vector<1x8x384xf32>
    tpu.vector_store %arg10[%c4, %c0_15, %c0_16], %28 {strides = array<i32>} : memref<8x8x384xf32, #tpu.memory_space<vmem>>, vector<1x8x384xf32>,
    %29 = vector.extract_strided_slice %8 {offsets = [40, 0], sizes = [8, 384], strides = [1, 1]} : vector<64x384xf32> to vector<8x384xf32>
    %c5 = arith.constant 5 : index
    %c0_17 = arith.constant 0 : index
    %c0_18 = arith.constant 0 : index
    %30 = vector.load %arg10[%c5, %c0_17, %c0_18] : memref<8x8x384xf32, #tpu.memory_space<vmem>>, vector<1x8x384xf32>
    %31 = vector.shape_cast %30 : vector<1x8x384xf32> to vector<8x384xf32>
    %32 = vector.shape_cast %29 : vector<8x384xf32> to vector<1x8x384xf32>
    tpu.vector_store %arg10[%c5, %c0_17, %c0_18], %32 {strides = array<i32>} : memref<8x8x384xf32, #tpu.memory_space<vmem>>, vector<1x8x384xf32>,
    %33 = vector.extract_strided_slice %8 {offsets = [48, 0], sizes = [8, 384], strides = [1, 1]} : vector<64x384xf32> to vector<8x384xf32>
    %c6 = arith.constant 6 : index
    %c0_19 = arith.constant 0 : index
    %c0_20 = arith.constant 0 : index
    %34 = vector.load %arg10[%c6, %c0_19, %c0_20] : memref<8x8x384xf32, #tpu.memory_space<vmem>>, vector<1x8x384xf32>
    %35 = vector.shape_cast %34 : vector<1x8x384xf32> to vector<8x384xf32>
    %36 = vector.shape_cast %33 : vector<8x384xf32> to vector<1x8x384xf32>
    tpu.vector_store %arg10[%c6, %c0_19, %c0_20], %36 {strides = array<i32>} : memref<8x8x384xf32, #tpu.memory_space<vmem>>, vector<1x8x384xf32>,
    %37 = vector.extract_strided_slice %8 {offsets = [56, 0], sizes = [8, 384], strides = [1, 1]} : vector<64x384xf32> to vector<8x384xf32>
    %c7 = arith.constant 7 : index
    %c0_21 = arith.constant 0 : index
    %c0_22 = arith.constant 0 : index
    %38 = vector.load %arg10[%c7, %c0_21, %c0_22] : memref<8x8x384xf32, #tpu.memory_space<vmem>>, vector<1x8x384xf32>
    %39 = vector.shape_cast %38 : vector<1x8x384xf32> to vector<8x384xf32>
    %40 = vector.shape_cast %37 : vector<8x384xf32> to vector<1x8x384xf32>
    tpu.vector_store %arg10[%c7, %c0_21, %c0_22], %40 {strides = array<i32>} : memref<8x8x384xf32, #tpu.memory_space<vmem>>, vector<1x8x384xf32>,
    %c0_23 = arith.constant 0 : index
    %c0_24 = arith.constant 0 : index
    %41 = vector.load %arg1[%c0_23, %c0_24] : memref<8x128xf32, #tpu.memory_space<vmem>>, vector<8x128xf32>
    %c0_25 = arith.constant 0 : index
    %c0_26 = arith.constant 0 : index
    %c0_27 = arith.constant 0 : index
    %42 = vector.load %arg10[%c0_25, %c0_26, %c0_27] : memref<8x8x384xf32, #tpu.memory_space<vmem>>, vector<1x8x384xf32>
    %43 = vector.shape_cast %42 : vector<1x8x384xf32> to vector<8x384xf32>
    %44 = arith.truncf %41 : vector<8x128xf32> to vector<8x128xbf16>
    %c0_28 = arith.constant 0 : index
    %c0_29 = arith.constant 0 : index
    %45 = vector.load %arg3[%c0_28, %c0_29] : memref<128x384xbf16, #tpu.memory_space<vmem>>, vector<128x384xbf16>
    %cst_30 = arith.constant dense<0.000000e+00> : vector<8x384xf32>
    %46 = tpu.matmul %44, %45, %cst_30 {dimension_numbers = #tpu.dot_dimension_numbers<[1], [0], [0], [1], [0, 0, 1, 1], [], []>} : vector<8x128xbf16>, vector<128x384xbf16>, vector<8x384xf32> -> vector<8x384xf32>
    %c0_31 = arith.constant 0 : index
    %c0_32 = arith.constant 0 : index
    %47 = vector.load %arg5[%c0_31, %c0_32] : memref<1x384xf32, #tpu.memory_space<vmem>>, vector<1x384xf32>
    %48 = vector.broadcast %47 : vector<1x384xf32> to vector<8x384xf32>
    %49 = arith.addf %46, %48 : vector<8x384xf32>
    %50 = vector.extract_strided_slice %43 {offsets = [0, 0], sizes = [8, 128], strides = [1, 1]} : vector<8x384xf32> to vector<8x128xf32>
    %51 = vector.extract_strided_slice %49 {offsets = [0, 0], sizes = [8, 128], strides = [1, 1]} : vector<8x384xf32> to vector<8x128xf32>
    %52 = arith.addf %50, %51 : vector<8x128xf32>
    %53 = arith.negf %52 : vector<8x128xf32>
    %54 = math.exp %53 : vector<8x128xf32>
    %cst_33 = arith.constant 1.000000e+00 : f32
    %55 = vector.broadcast %cst_33 : f32 to vector<8x128xf32>
    %56 = arith.addf %55, %54 : vector<8x128xf32>
    %57 = arith.divf %55, %56 : vector<8x128xf32>
    %58 = vector.extract_strided_slice %43 {offsets = [0, 128], sizes = [8, 128], strides = [1, 1]} : vector<8x384xf32> to vector<8x128xf32>
    %59 = vector.extract_strided_slice %49 {offsets = [0, 128], sizes = [8, 128], strides = [1, 1]} : vector<8x384xf32> to vector<8x128xf32>
    %60 = arith.addf %58, %59 : vector<8x128xf32>
    %61 = arith.negf %60 : vector<8x128xf32>
    %62 = math.exp %61 : vector<8x128xf32>
    %cst_34 = arith.constant 1.000000e+00 : f32
    %63 = vector.broadcast %cst_34 : f32 to vector<8x128xf32>
    %64 = arith.addf %63, %62 : vector<8x128xf32>
    %65 = arith.divf %63, %64 : vector<8x128xf32>
    %66 = vector.extract_strided_slice %43 {offsets = [0, 256], sizes = [8, 128], strides = [1, 1]} : vector<8x384xf32> to vector<8x128xf32>
    %67 = vector.extract_strided_slice %49 {offsets = [0, 256], sizes = [8, 128], strides = [1, 1]} : vector<8x384xf32> to vector<8x128xf32>
    %68 = arith.mulf %57, %67 : vector<8x128xf32>
    %69 = arith.addf %66, %68 : vector<8x128xf32>
    %70 = math.tanh %69 : vector<8x128xf32>
    %cst_35 = arith.constant 1.000000e+00 : f32
    %71 = vector.broadcast %cst_35 : f32 to vector<8x128xf32>
    %72 = arith.subf %71, %65 : vector<8x128xf32>
    %73 = arith.mulf %72, %70 : vector<8x128xf32>
    %74 = arith.mulf %65, %41 : vector<8x128xf32>
    %75 = arith.addf %73, %74 : vector<8x128xf32>
    %76 = arith.truncf %75 : vector<8x128xf32> to vector<8x128xbf16>
    %c0_36 = arith.constant 0 : index
    %c0_37 = arith.constant 0 : index
    %77 = vector.load %arg6[%c0_36, %c0_37] : memref<128x128xbf16, #tpu.memory_space<vmem>>, vector<128x128xbf16>
    %cst_38 = arith.constant dense<0.000000e+00> : vector<8x128xf32>
    %78 = tpu.matmul %76, %77, %cst_38 {dimension_numbers = #tpu.dot_dimension_numbers<[1], [0], [0], [1], [0, 0, 1, 1], [], []>} : vector<8x128xbf16>, vector<128x128xbf16>, vector<8x128xf32> -> vector<8x128xf32>
    %c0_39 = arith.constant 0 : index
    %c0_40 = arith.constant 0 : index
    %79 = vector.load %arg7[%c0_39, %c0_40] : memref<1x128xf32, #tpu.memory_space<vmem>>, vector<1x128xf32>
    %80 = vector.broadcast %79 : vector<1x128xf32> to vector<8x128xf32>
    %81 = arith.addf %78, %80 : vector<8x128xf32>
    %82 = tpu.iota {dimensions = array<i32: 1>} : vector<1x128xi32>
    %c64_i32 = arith.constant 64 : i32
    %83 = vector.broadcast %c64_i32 : i32 to vector<1x128xi32>
    %84 = arith.cmpi slt, %82, %83 : vector<1x128xi32>
    %cst_41 = arith.constant -1.000000e+30 : f32
    %85 = vector.shape_cast %84 : vector<1x128xi1> to vector<1x128xi1>
    %86 = vector.broadcast %85 : vector<1x128xi1> to vector<8x128xi1>
    %87 = vector.broadcast %cst_41 : f32 to vector<8x128xf32>
    %88 = arith.select %86, %81, %87 : vector<8x128xi1>, vector<8x128xf32>
    %cst_42 = arith.constant dense<0xFF800000> : vector<8xf32>
    %89 = vector.multi_reduction <maximumf>, %88, %cst_42 [1] : vector<8x128xf32> to vector<8xf32>
    %90 = vector.shape_cast %89 : vector<8xf32> to vector<8x1xf32>
    %91 = vector.broadcast %90 : vector<8x1xf32> to vector<8x128xf32>
    %92 = arith.subf %88, %91 : vector<8x128xf32>
    %93 = math.exp %92 : vector<8x128xf32>
    %cst_43 = arith.constant 0.000000e+00 : f32
    %94 = vector.shape_cast %84 : vector<1x128xi1> to vector<1x128xi1>
    %95 = vector.broadcast %94 : vector<1x128xi1> to vector<8x128xi1>
    %96 = vector.broadcast %cst_43 : f32 to vector<8x128xf32>
    %97 = arith.select %95, %93, %96 : vector<8x128xi1>, vector<8x128xf32>
    %cst_44 = arith.constant dense<0.000000e+00> : vector<8xf32>
    %98 = vector.multi_reduction <add>, %97, %cst_44 [1] : vector<8x128xf32> to vector<8xf32>
    %99 = vector.shape_cast %98 : vector<8xf32> to vector<8x1xf32>
    %100 = math.log %99 : vector<8x1xf32>
    %101 = vector.broadcast %100 : vector<8x1xf32> to vector<8x128xf32>
    %102 = arith.subf %92, %101 : vector<8x128xf32>
    %c0_45 = arith.constant 0 : index
    %c0_46 = arith.constant 0 : index
    %103 = vector.load %arg8[%c0_45, %c0_46] : memref<8x128xf32, #tpu.memory_space<vmem>>, vector<8x128xf32>
    tpu.vector_store %arg8[%c0_45, %c0_46], %102 {strides = array<i32>} : memref<8x128xf32, #tpu.memory_space<vmem>>, vector<8x128xf32>,
    %c1_i32 = arith.constant 1 : i32
    %104 = arith.index_cast %c1_i32 : i32 to index
    %c0_47 = arith.constant 0 : index
    %c0_48 = arith.constant 0 : index
    %105 = vector.load %arg10[%104, %c0_47, %c0_48] : memref<8x8x384xf32, #tpu.memory_space<vmem>>, vector<1x8x384xf32>
    %106 = vector.shape_cast %105 : vector<1x8x384xf32> to vector<8x384xf32>
    %107 = arith.truncf %75 : vector<8x128xf32> to vector<8x128xbf16>
    %c0_49 = arith.constant 0 : index
    %c0_50 = arith.constant 0 : index
    %108 = vector.load %arg3[%c0_49, %c0_50] : memref<128x384xbf16, #tpu.memory_space<vmem>>, vector<128x384xbf16>
    %cst_51 = arith.constant dense<0.000000e+00> : vector<8x384xf32>
    %109 = tpu.matmul %107, %108, %cst_51 {dimension_numbers = #tpu.dot_dimension_numbers<[1], [0], [0], [1], [0, 0, 1, 1], [], []>} : vector<8x128xbf16>, vector<128x384xbf16>, vector<8x384xf32> -> vector<8x384xf32>
    %c0_52 = arith.constant 0 : index
    %c0_53 = arith.constant 0 : index
    %110 = vector.load %arg5[%c0_52, %c0_53] : memref<1x384xf32, #tpu.memory_space<vmem>>, vector<1x384xf32>
    %111 = vector.broadcast %110 : vector<1x384xf32> to vector<8x384xf32>
    %112 = arith.addf %109, %111 : vector<8x384xf32>
    %113 = vector.extract_strided_slice %106 {offsets = [0, 0], sizes = [8, 128], strides = [1, 1]} : vector<8x384xf32> to vector<8x128xf32>
    %114 = vector.extract_strided_slice %112 {offsets = [0, 0], sizes = [8, 128], strides = [1, 1]} : vector<8x384xf32> to vector<8x128xf32>
    %115 = arith.addf %113, %114 : vector<8x128xf32>
    %116 = arith.negf %115 : vector<8x128xf32>
    %117 = math.exp %116 : vector<8x128xf32>
    %cst_54 = arith.constant 1.000000e+00 : f32
    %118 = vector.broadcast %cst_54 : f32 to vector<8x128xf32>
    %119 = arith.addf %118, %117 : vector<8x128xf32>
    %120 = arith.divf %118, %119 : vector<8x128xf32>
    %121 = vector.extract_strided_slice %106 {offsets = [0, 128], sizes = [8, 128], strides = [1, 1]} : vector<8x384xf32> to vector<8x128xf32>
    %122 = vector.extract_strided_slice %112 {offsets = [0, 128], sizes = [8, 128], strides = [1, 1]} : vector<8x384xf32> to vector<8x128xf32>
    %123 = arith.addf %121, %122 : vector<8x128xf32>
    %124 = arith.negf %123 : vector<8x128xf32>
    %125 = math.exp %124 : vector<8x128xf32>
    %cst_55 = arith.constant 1.000000e+00 : f32
    %126 = vector.broadcast %cst_55 : f32 to vector<8x128xf32>
    %127 = arith.addf %126, %125 : vector<8x128xf32>
    %128 = arith.divf %126, %127 : vector<8x128xf32>
    %129 = vector.extract_strided_slice %106 {offsets = [0, 256], sizes = [8, 128], strides = [1, 1]} : vector<8x384xf32> to vector<8x128xf32>
    %130 = vector.extract_strided_slice %112 {offsets = [0, 256], sizes = [8, 128], strides = [1, 1]} : vector<8x384xf32> to vector<8x128xf32>
    %131 = arith.mulf %120, %130 : vector<8x128xf32>
    %132 = arith.addf %129, %131 : vector<8x128xf32>
    %133 = math.tanh %132 : vector<8x128xf32>
    %cst_56 = arith.constant 1.000000e+00 : f32
    %134 = vector.broadcast %cst_56 : f32 to vector<8x128xf32>
    %135 = arith.subf %134, %128 : vector<8x128xf32>
    %136 = arith.mulf %135, %133 : vector<8x128xf32>
    %137 = arith.mulf %128, %75 : vector<8x128xf32>
    %138 = arith.addf %136, %137 : vector<8x128xf32>
    %c2_i32 = arith.constant 2 : i32
    %139 = arith.index_cast %c2_i32 : i32 to index
    %c0_57 = arith.constant 0 : index
    %c0_58 = arith.constant 0 : index
    %140 = vector.load %arg10[%139, %c0_57, %c0_58] : memref<8x8x384xf32, #tpu.memory_space<vmem>>, vector<1x8x384xf32>
    %141 = vector.shape_cast %140 : vector<1x8x384xf32> to vector<8x384xf32>
    %142 = arith.truncf %138 : vector<8x128xf32> to vector<8x128xbf16>
    %c0_59 = arith.constant 0 : index
    %c0_60 = arith.constant 0 : index
    %143 = vector.load %arg3[%c0_59, %c0_60] : memref<128x384xbf16, #tpu.memory_space<vmem>>, vector<128x384xbf16>
    %cst_61 = arith.constant dense<0.000000e+00> : vector<8x384xf32>
    %144 = tpu.matmul %142, %143, %cst_61 {dimension_numbers = #tpu.dot_dimension_numbers<[1], [0], [0], [1], [0, 0, 1, 1], [], []>} : vector<8x128xbf16>, vector<128x384xbf16>, vector<8x384xf32> -> vector<8x384xf32>
    %c0_62 = arith.constant 0 : index
    %c0_63 = arith.constant 0 : index
    %145 = vector.load %arg5[%c0_62, %c0_63] : memref<1x384xf32, #tpu.memory_space<vmem>>, vector<1x384xf32>
    %146 = vector.broadcast %145 : vector<1x384xf32> to vector<8x384xf32>
    %147 = arith.addf %144, %146 : vector<8x384xf32>
    %148 = vector.extract_strided_slice %141 {offsets = [0, 0], sizes = [8, 128], strides = [1, 1]} : vector<8x384xf32> to vector<8x128xf32>
    %149 = vector.extract_strided_slice %147 {offsets = [0, 0], sizes = [8, 128], strides = [1, 1]} : vector<8x384xf32> to vector<8x128xf32>
    %150 = arith.addf %148, %149 : vector<8x128xf32>
    %151 = arith.negf %150 : vector<8x128xf32>
    %152 = math.exp %151 : vector<8x128xf32>
    %cst_64 = arith.constant 1.000000e+00 : f32
    %153 = vector.broadcast %cst_64 : f32 to vector<8x128xf32>
    %154 = arith.addf %153, %152 : vector<8x128xf32>
    %155 = arith.divf %153, %154 : vector<8x128xf32>
    %156 = vector.extract_strided_slice %141 {offsets = [0, 128], sizes = [8, 128], strides = [1, 1]} : vector<8x384xf32> to vector<8x128xf32>
    %157 = vector.extract_strided_slice %147 {offsets = [0, 128], sizes = [8, 128], strides = [1, 1]} : vector<8x384xf32> to vector<8x128xf32>
    %158 = arith.addf %156, %157 : vector<8x128xf32>
    %159 = arith.negf %158 : vector<8x128xf32>
    %160 = math.exp %159 : vector<8x128xf32>
    %cst_65 = arith.constant 1.000000e+00 : f32
    %161 = vector.broadcast %cst_65 : f32 to vector<8x128xf32>
    %162 = arith.addf %161, %160 : vector<8x128xf32>
    %163 = arith.divf %161, %162 : vector<8x128xf32>
    %164 = vector.extract_strided_slice %141 {offsets = [0, 256], sizes = [8, 128], strides = [1, 1]} : vector<8x384xf32> to vector<8x128xf32>
    %165 = vector.extract_strided_slice %147 {offsets = [0, 256], sizes = [8, 128], strides = [1, 1]} : vector<8x384xf32> to vector<8x128xf32>
    %166 = arith.mulf %155, %165 : vector<8x128xf32>
    %167 = arith.addf %164, %166 : vector<8x128xf32>
    %168 = math.tanh %167 : vector<8x128xf32>
    %cst_66 = arith.constant 1.000000e+00 : f32
    %169 = vector.broadcast %cst_66 : f32 to vector<8x128xf32>
    %170 = arith.subf %169, %163 : vector<8x128xf32>
    %171 = arith.mulf %170, %168 : vector<8x128xf32>
    %172 = arith.mulf %163, %138 : vector<8x128xf32>
    %173 = arith.addf %171, %172 : vector<8x128xf32>
    %c3_i32 = arith.constant 3 : i32
    %174 = arith.index_cast %c3_i32 : i32 to index
    %c0_67 = arith.constant 0 : index
    %c0_68 = arith.constant 0 : index
    %175 = vector.load %arg10[%174, %c0_67, %c0_68] : memref<8x8x384xf32, #tpu.memory_space<vmem>>, vector<1x8x384xf32>
    %176 = vector.shape_cast %175 : vector<1x8x384xf32> to vector<8x384xf32>
    %177 = arith.truncf %173 : vector<8x128xf32> to vector<8x128xbf16>
    %c0_69 = arith.constant 0 : index
    %c0_70 = arith.constant 0 : index
    %178 = vector.load %arg3[%c0_69, %c0_70] : memref<128x384xbf16, #tpu.memory_space<vmem>>, vector<128x384xbf16>
    %cst_71 = arith.constant dense<0.000000e+00> : vector<8x384xf32>
    %179 = tpu.matmul %177, %178, %cst_71 {dimension_numbers = #tpu.dot_dimension_numbers<[1], [0], [0], [1], [0, 0, 1, 1], [], []>} : vector<8x128xbf16>, vector<128x384xbf16>, vector<8x384xf32> -> vector<8x384xf32>
    %c0_72 = arith.constant 0 : index
    %c0_73 = arith.constant 0 : index
    %180 = vector.load %arg5[%c0_72, %c0_73] : memref<1x384xf32, #tpu.memory_space<vmem>>, vector<1x384xf32>
    %181 = vector.broadcast %180 : vector<1x384xf32> to vector<8x384xf32>
    %182 = arith.addf %179, %181 : vector<8x384xf32>
    %183 = vector.extract_strided_slice %176 {offsets = [0, 0], sizes = [8, 128], strides = [1, 1]} : vector<8x384xf32> to vector<8x128xf32>
    %184 = vector.extract_strided_slice %182 {offsets = [0, 0], sizes = [8, 128], strides = [1, 1]} : vector<8x384xf32> to vector<8x128xf32>
    %185 = arith.addf %183, %184 : vector<8x128xf32>
    %186 = arith.negf %185 : vector<8x128xf32>
    %187 = math.exp %186 : vector<8x128xf32>
    %cst_74 = arith.constant 1.000000e+00 : f32
    %188 = vector.broadcast %cst_74 : f32 to vector<8x128xf32>
    %189 = arith.addf %188, %187 : vector<8x128xf32>
    %190 = arith.divf %188, %189 : vector<8x128xf32>
    %191 = vector.extract_strided_slice %176 {offsets = [0, 128], sizes = [8, 128], strides = [1, 1]} : vector<8x384xf32> to vector<8x128xf32>
    %192 = vector.extract_strided_slice %182 {offsets = [0, 128], sizes = [8, 128], strides = [1, 1]} : vector<8x384xf32> to vector<8x128xf32>
    %193 = arith.addf %191, %192 : vector<8x128xf32>
    %194 = arith.negf %193 : vector<8x128xf32>
    %195 = math.exp %194 : vector<8x128xf32>
    %cst_75 = arith.constant 1.000000e+00 : f32
    %196 = vector.broadcast %cst_75 : f32 to vector<8x128xf32>
    %197 = arith.addf %196, %195 : vector<8x128xf32>
    %198 = arith.divf %196, %197 : vector<8x128xf32>
    %199 = vector.extract_strided_slice %176 {offsets = [0, 256], sizes = [8, 128], strides = [1, 1]} : vector<8x384xf32> to vector<8x128xf32>
    %200 = vector.extract_strided_slice %182 {offsets = [0, 256], sizes = [8, 128], strides = [1, 1]} : vector<8x384xf32> to vector<8x128xf32>
    %201 = arith.mulf %190, %200 : vector<8x128xf32>
    %202 = arith.addf %199, %201 : vector<8x128xf32>
    %203 = math.tanh %202 : vector<8x128xf32>
    %cst_76 = arith.constant 1.000000e+00 : f32
    %204 = vector.broadcast %cst_76 : f32 to vector<8x128xf32>
    %205 = arith.subf %204, %198 : vector<8x128xf32>
    %206 = arith.mulf %205, %203 : vector<8x128xf32>
    %207 = arith.mulf %198, %173 : vector<8x128xf32>
    %208 = arith.addf %206, %207 : vector<8x128xf32>
    %c4_i32 = arith.constant 4 : i32
    %209 = arith.index_cast %c4_i32 : i32 to index
    %c0_77 = arith.constant 0 : index
    %c0_78 = arith.constant 0 : index
    %210 = vector.load %arg10[%209, %c0_77, %c0_78] : memref<8x8x384xf32, #tpu.memory_space<vmem>>, vector<1x8x384xf32>
    %211 = vector.shape_cast %210 : vector<1x8x384xf32> to vector<8x384xf32>
    %212 = arith.truncf %208 : vector<8x128xf32> to vector<8x128xbf16>
    %c0_79 = arith.constant 0 : index
    %c0_80 = arith.constant 0 : index
    %213 = vector.load %arg3[%c0_79, %c0_80] : memref<128x384xbf16, #tpu.memory_space<vmem>>, vector<128x384xbf16>
    %cst_81 = arith.constant dense<0.000000e+00> : vector<8x384xf32>
    %214 = tpu.matmul %212, %213, %cst_81 {dimension_numbers = #tpu.dot_dimension_numbers<[1], [0], [0], [1], [0, 0, 1, 1], [], []>} : vector<8x128xbf16>, vector<128x384xbf16>, vector<8x384xf32> -> vector<8x384xf32>
    %c0_82 = arith.constant 0 : index
    %c0_83 = arith.constant 0 : index
    %215 = vector.load %arg5[%c0_82, %c0_83] : memref<1x384xf32, #tpu.memory_space<vmem>>, vector<1x384xf32>
    %216 = vector.broadcast %215 : vector<1x384xf32> to vector<8x384xf32>
    %217 = arith.addf %214, %216 : vector<8x384xf32>
    %218 = vector.extract_strided_slice %211 {offsets = [0, 0], sizes = [8, 128], strides = [1, 1]} : vector<8x384xf32> to vector<8x128xf32>
    %219 = vector.extract_strided_slice %217 {offsets = [0, 0], sizes = [8, 128], strides = [1, 1]} : vector<8x384xf32> to vector<8x128xf32>
    %220 = arith.addf %218, %219 : vector<8x128xf32>
    %221 = arith.negf %220 : vector<8x128xf32>
    %222 = math.exp %221 : vector<8x128xf32>
    %cst_84 = arith.constant 1.000000e+00 : f32
    %223 = vector.broadcast %cst_84 : f32 to vector<8x128xf32>
    %224 = arith.addf %223, %222 : vector<8x128xf32>
    %225 = arith.divf %223, %224 : vector<8x128xf32>
    %226 = vector.extract_strided_slice %211 {offsets = [0, 128], sizes = [8, 128], strides = [1, 1]} : vector<8x384xf32> to vector<8x128xf32>
    %227 = vector.extract_strided_slice %217 {offsets = [0, 128], sizes = [8, 128], strides = [1, 1]} : vector<8x384xf32> to vector<8x128xf32>
    %228 = arith.addf %226, %227 : vector<8x128xf32>
    %229 = arith.negf %228 : vector<8x128xf32>
    %230 = math.exp %229 : vector<8x128xf32>
    %cst_85 = arith.constant 1.000000e+00 : f32
    %231 = vector.broadcast %cst_85 : f32 to vector<8x128xf32>
    %232 = arith.addf %231, %230 : vector<8x128xf32>
    %233 = arith.divf %231, %232 : vector<8x128xf32>
    %234 = vector.extract_strided_slice %211 {offsets = [0, 256], sizes = [8, 128], strides = [1, 1]} : vector<8x384xf32> to vector<8x128xf32>
    %235 = vector.extract_strided_slice %217 {offsets = [0, 256], sizes = [8, 128], strides = [1, 1]} : vector<8x384xf32> to vector<8x128xf32>
    %236 = arith.mulf %225, %235 : vector<8x128xf32>
    %237 = arith.addf %234, %236 : vector<8x128xf32>
    %238 = math.tanh %237 : vector<8x128xf32>
    %cst_86 = arith.constant 1.000000e+00 : f32
    %239 = vector.broadcast %cst_86 : f32 to vector<8x128xf32>
    %240 = arith.subf %239, %233 : vector<8x128xf32>
    %241 = arith.mulf %240, %238 : vector<8x128xf32>
    %242 = arith.mulf %233, %208 : vector<8x128xf32>
    %243 = arith.addf %241, %242 : vector<8x128xf32>
    %c5_i32 = arith.constant 5 : i32
    %244 = arith.index_cast %c5_i32 : i32 to index
    %c0_87 = arith.constant 0 : index
    %c0_88 = arith.constant 0 : index
    %245 = vector.load %arg10[%244, %c0_87, %c0_88] : memref<8x8x384xf32, #tpu.memory_space<vmem>>, vector<1x8x384xf32>
    %246 = vector.shape_cast %245 : vector<1x8x384xf32> to vector<8x384xf32>
    %247 = arith.truncf %243 : vector<8x128xf32> to vector<8x128xbf16>
    %c0_89 = arith.constant 0 : index
    %c0_90 = arith.constant 0 : index
    %248 = vector.load %arg3[%c0_89, %c0_90] : memref<128x384xbf16, #tpu.memory_space<vmem>>, vector<128x384xbf16>
    %cst_91 = arith.constant dense<0.000000e+00> : vector<8x384xf32>
    %249 = tpu.matmul %247, %248, %cst_91 {dimension_numbers = #tpu.dot_dimension_numbers<[1], [0], [0], [1], [0, 0, 1, 1], [], []>} : vector<8x128xbf16>, vector<128x384xbf16>, vector<8x384xf32> -> vector<8x384xf32>
    %c0_92 = arith.constant 0 : index
    %c0_93 = arith.constant 0 : index
    %250 = vector.load %arg5[%c0_92, %c0_93] : memref<1x384xf32, #tpu.memory_space<vmem>>, vector<1x384xf32>
    %251 = vector.broadcast %250 : vector<1x384xf32> to vector<8x384xf32>
    %252 = arith.addf %249, %251 : vector<8x384xf32>
    %253 = vector.extract_strided_slice %246 {offsets = [0, 0], sizes = [8, 128], strides = [1, 1]} : vector<8x384xf32> to vector<8x128xf32>
    %254 = vector.extract_strided_slice %252 {offsets = [0, 0], sizes = [8, 128], strides = [1, 1]} : vector<8x384xf32> to vector<8x128xf32>
    %255 = arith.addf %253, %254 : vector<8x128xf32>
    %256 = arith.negf %255 : vector<8x128xf32>
    %257 = math.exp %256 : vector<8x128xf32>
    %cst_94 = arith.constant 1.000000e+00 : f32
    %258 = vector.broadcast %cst_94 : f32 to vector<8x128xf32>
    %259 = arith.addf %258, %257 : vector<8x128xf32>
    %260 = arith.divf %258, %259 : vector<8x128xf32>
    %261 = vector.extract_strided_slice %246 {offsets = [0, 128], sizes = [8, 128], strides = [1, 1]} : vector<8x384xf32> to vector<8x128xf32>
    %262 = vector.extract_strided_slice %252 {offsets = [0, 128], sizes = [8, 128], strides = [1, 1]} : vector<8x384xf32> to vector<8x128xf32>
    %263 = arith.addf %261, %262 : vector<8x128xf32>
    %264 = arith.negf %263 : vector<8x128xf32>
    %265 = math.exp %264 : vector<8x128xf32>
    %cst_95 = arith.constant 1.000000e+00 : f32
    %266 = vector.broadcast %cst_95 : f32 to vector<8x128xf32>
    %267 = arith.addf %266, %265 : vector<8x128xf32>
    %268 = arith.divf %266, %267 : vector<8x128xf32>
    %269 = vector.extract_strided_slice %246 {offsets = [0, 256], sizes = [8, 128], strides = [1, 1]} : vector<8x384xf32> to vector<8x128xf32>
    %270 = vector.extract_strided_slice %252 {offsets = [0, 256], sizes = [8, 128], strides = [1, 1]} : vector<8x384xf32> to vector<8x128xf32>
    %271 = arith.mulf %260, %270 : vector<8x128xf32>
    %272 = arith.addf %269, %271 : vector<8x128xf32>
    %273 = math.tanh %272 : vector<8x128xf32>
    %cst_96 = arith.constant 1.000000e+00 : f32
    %274 = vector.broadcast %cst_96 : f32 to vector<8x128xf32>
    %275 = arith.subf %274, %268 : vector<8x128xf32>
    %276 = arith.mulf %275, %273 : vector<8x128xf32>
    %277 = arith.mulf %268, %243 : vector<8x128xf32>
    %278 = arith.addf %276, %277 : vector<8x128xf32>
    %c6_i32 = arith.constant 6 : i32
    %279 = arith.index_cast %c6_i32 : i32 to index
    %c0_97 = arith.constant 0 : index
    %c0_98 = arith.constant 0 : index
    %280 = vector.load %arg10[%279, %c0_97, %c0_98] : memref<8x8x384xf32, #tpu.memory_space<vmem>>, vector<1x8x384xf32>
    %281 = vector.shape_cast %280 : vector<1x8x384xf32> to vector<8x384xf32>
    %282 = arith.truncf %278 : vector<8x128xf32> to vector<8x128xbf16>
    %c0_99 = arith.constant 0 : index
    %c0_100 = arith.constant 0 : index
    %283 = vector.load %arg3[%c0_99, %c0_100] : memref<128x384xbf16, #tpu.memory_space<vmem>>, vector<128x384xbf16>
    %cst_101 = arith.constant dense<0.000000e+00> : vector<8x384xf32>
    %284 = tpu.matmul %282, %283, %cst_101 {dimension_numbers = #tpu.dot_dimension_numbers<[1], [0], [0], [1], [0, 0, 1, 1], [], []>} : vector<8x128xbf16>, vector<128x384xbf16>, vector<8x384xf32> -> vector<8x384xf32>
    %c0_102 = arith.constant 0 : index
    %c0_103 = arith.constant 0 : index
    %285 = vector.load %arg5[%c0_102, %c0_103] : memref<1x384xf32, #tpu.memory_space<vmem>>, vector<1x384xf32>
    %286 = vector.broadcast %285 : vector<1x384xf32> to vector<8x384xf32>
    %287 = arith.addf %284, %286 : vector<8x384xf32>
    %288 = vector.extract_strided_slice %281 {offsets = [0, 0], sizes = [8, 128], strides = [1, 1]} : vector<8x384xf32> to vector<8x128xf32>
    %289 = vector.extract_strided_slice %287 {offsets = [0, 0], sizes = [8, 128], strides = [1, 1]} : vector<8x384xf32> to vector<8x128xf32>
    %290 = arith.addf %288, %289 : vector<8x128xf32>
    %291 = arith.negf %290 : vector<8x128xf32>
    %292 = math.exp %291 : vector<8x128xf32>
    %cst_104 = arith.constant 1.000000e+00 : f32
    %293 = vector.broadcast %cst_104 : f32 to vector<8x128xf32>
    %294 = arith.addf %293, %292 : vector<8x128xf32>
    %295 = arith.divf %293, %294 : vector<8x128xf32>
    %296 = vector.extract_strided_slice %281 {offsets = [0, 128], sizes = [8, 128], strides = [1, 1]} : vector<8x384xf32> to vector<8x128xf32>
    %297 = vector.extract_strided_slice %287 {offsets = [0, 128], sizes = [8, 128], strides = [1, 1]} : vector<8x384xf32> to vector<8x128xf32>
    %298 = arith.addf %296, %297 : vector<8x128xf32>
    %299 = arith.negf %298 : vector<8x128xf32>
    %300 = math.exp %299 : vector<8x128xf32>
    %cst_105 = arith.constant 1.000000e+00 : f32
    %301 = vector.broadcast %cst_105 : f32 to vector<8x128xf32>
    %302 = arith.addf %301, %300 : vector<8x128xf32>
    %303 = arith.divf %301, %302 : vector<8x128xf32>
    %304 = vector.extract_strided_slice %281 {offsets = [0, 256], sizes = [8, 128], strides = [1, 1]} : vector<8x384xf32> to vector<8x128xf32>
    %305 = vector.extract_strided_slice %287 {offsets = [0, 256], sizes = [8, 128], strides = [1, 1]} : vector<8x384xf32> to vector<8x128xf32>
    %306 = arith.mulf %295, %305 : vector<8x128xf32>
    %307 = arith.addf %304, %306 : vector<8x128xf32>
    %308 = math.tanh %307 : vector<8x128xf32>
    %cst_106 = arith.constant 1.000000e+00 : f32
    %309 = vector.broadcast %cst_106 : f32 to vector<8x128xf32>
    %310 = arith.subf %309, %303 : vector<8x128xf32>
    %311 = arith.mulf %310, %308 : vector<8x128xf32>
    %312 = arith.mulf %303, %278 : vector<8x128xf32>
    %313 = arith.addf %311, %312 : vector<8x128xf32>
    %c7_i32 = arith.constant 7 : i32
    %314 = arith.index_cast %c7_i32 : i32 to index
    %c0_107 = arith.constant 0 : index
    %c0_108 = arith.constant 0 : index
    %315 = vector.load %arg10[%314, %c0_107, %c0_108] : memref<8x8x384xf32, #tpu.memory_space<vmem>>, vector<1x8x384xf32>
    %316 = vector.shape_cast %315 : vector<1x8x384xf32> to vector<8x384xf32>
    %317 = arith.truncf %313 : vector<8x128xf32> to vector<8x128xbf16>
    %c0_109 = arith.constant 0 : index
    %c0_110 = arith.constant 0 : index
    %318 = vector.load %arg3[%c0_109, %c0_110] : memref<128x384xbf16, #tpu.memory_space<vmem>>, vector<128x384xbf16>
    %cst_111 = arith.constant dense<0.000000e+00> : vector<8x384xf32>
    %319 = tpu.matmul %317, %318, %cst_111 {dimension_numbers = #tpu.dot_dimension_numbers<[1], [0], [0], [1], [0, 0, 1, 1], [], []>} : vector<8x128xbf16>, vector<128x384xbf16>, vector<8x384xf32> -> vector<8x384xf32>
    %c0_112 = arith.constant 0 : index
    %c0_113 = arith.constant 0 : index
    %320 = vector.load %arg5[%c0_112, %c0_113] : memref<1x384xf32, #tpu.memory_space<vmem>>, vector<1x384xf32>
    %321 = vector.broadcast %320 : vector<1x384xf32> to vector<8x384xf32>
    %322 = arith.addf %319, %321 : vector<8x384xf32>
    %323 = vector.extract_strided_slice %316 {offsets = [0, 0], sizes = [8, 128], strides = [1, 1]} : vector<8x384xf32> to vector<8x128xf32>
    %324 = vector.extract_strided_slice %322 {offsets = [0, 0], sizes = [8, 128], strides = [1, 1]} : vector<8x384xf32> to vector<8x128xf32>
    %325 = arith.addf %323, %324 : vector<8x128xf32>
    %326 = arith.negf %325 : vector<8x128xf32>
    %327 = math.exp %326 : vector<8x128xf32>
    %cst_114 = arith.constant 1.000000e+00 : f32
    %328 = vector.broadcast %cst_114 : f32 to vector<8x128xf32>
    %329 = arith.addf %328, %327 : vector<8x128xf32>
    %330 = arith.divf %328, %329 : vector<8x128xf32>
    %331 = vector.extract_strided_slice %316 {offsets = [0, 128], sizes = [8, 128], strides = [1, 1]} : vector<8x384xf32> to vector<8x128xf32>
    %332 = vector.extract_strided_slice %322 {offsets = [0, 128], sizes = [8, 128], strides = [1, 1]} : vector<8x384xf32> to vector<8x128xf32>
    %333 = arith.addf %331, %332 : vector<8x128xf32>
    %334 = arith.negf %333 : vector<8x128xf32>
    %335 = math.exp %334 : vector<8x128xf32>
    %cst_115 = arith.constant 1.000000e+00 : f32
    %336 = vector.broadcast %cst_115 : f32 to vector<8x128xf32>
    %337 = arith.addf %336, %335 : vector<8x128xf32>
    %338 = arith.divf %336, %337 : vector<8x128xf32>
    %339 = vector.extract_strided_slice %316 {offsets = [0, 256], sizes = [8, 128], strides = [1, 1]} : vector<8x384xf32> to vector<8x128xf32>
    %340 = vector.extract_strided_slice %322 {offsets = [0, 256], sizes = [8, 128], strides = [1, 1]} : vector<8x384xf32> to vector<8x128xf32>
    %341 = arith.mulf %330, %340 : vector<8x128xf32>
    %342 = arith.addf %339, %341 : vector<8x128xf32>
    %343 = math.tanh %342 : vector<8x128xf32>
    %cst_116 = arith.constant 1.000000e+00 : f32
    %344 = vector.broadcast %cst_116 : f32 to vector<8x128xf32>
    %345 = arith.subf %344, %338 : vector<8x128xf32>
    %346 = arith.mulf %345, %343 : vector<8x128xf32>
    %347 = arith.mulf %338, %313 : vector<8x128xf32>
    %348 = arith.addf %346, %347 : vector<8x128xf32>
    %c7_i32_117 = arith.constant 7 : i32
    %c0_118 = arith.constant 0 : index
    %c0_119 = arith.constant 0 : index
    %349 = vector.load %arg9[%c0_118, %c0_119] : memref<8x128xf32, #tpu.memory_space<vmem>>, vector<8x128xf32>
    tpu.vector_store %arg9[%c0_118, %c0_119], %348 {strides = array<i32>} : memref<8x128xf32, #tpu.memory_space<vmem>>, vector<8x128xf32>,
    return
  }
}

</mosaic_0001>

<llo_original>
// kernel: decoder_rnn_forward.1
$region0: #{decoder_rnn_forward.1}
  #allocation0 [shape = 'u32[]', space=smem, size = 0x4, offset = 0x4, fixed_abs, tag = 'smem constant byte address 0x4 - core index']
  #allocation1 [shape = 'u32[144,128]{1,0:T(1,128)}', space=vmem, size = 0x12000, scoped, tag = 'internal scratch']
  #allocation2 [shape = 'f32[8,8,384]{2,1,0:T(8,128)}', space=vmem, size = 0x18000, scoped, tag = 'scratch operand']
  %s0 = inlined_call_operand.vmem [shape: f32[64,128], index: 0, kind: input, shape index: {}]
  %s1 = inlined_call_operand.vmem [shape: f32[8,128], index: 1, kind: input, shape index: {}, may-alias: {1,9}]
  %s2 = inlined_call_operand.hbm [shape: bf16[128,384], index: 2, kind: input, shape index: {}]
  %s3 = inlined_call_operand.hbm [shape: bf16[128,384], index: 3, kind: input, shape index: {}]
  %s4 = inlined_call_operand.vmem [shape: f32[1,384], index: 4, kind: input, shape index: {}]
  %s5 = inlined_call_operand.vmem [shape: f32[1,384], index: 5, kind: input, shape index: {}]
  %s6 = inlined_call_operand.vmem [shape: bf16[128,128], index: 6, kind: input, shape index: {}]
  %s7 = inlined_call_operand.vmem [shape: f32[1,128], index: 7, kind: input, shape index: {}]
  %s8 = inlined_call_operand.vmem [shape: f32[8,128], index: 8, kind: output, shape index: {0}]
  %s9 = inlined_call_operand.vmem [shape: f32[8,128], index: 9, kind: output, shape index: {1}, may-alias: {1,9}]
  %10 = xla_tuple %s8, %s9
  %s11 = sld [smem:[#allocation0]]
  $region58: #{decoder_rnn_forward.1} parent=0
    _
  %s13 = ssub.s32 1, %s11
  %s14 = scalar_select 0, %s13, %s11
  $region1: #{decoder_rnn_forward.1} parent=0
    #allocation3 [shape = 'u8[98304]{0}', space=vmem, size = 0x18000, scoped, tag = 'input window, operand 2, single buffered']
    #allocation4 [shape = 's32[1]{0}', space=sflag, size = 0x4, scoped, tag = 'scoped memory for decoder_rnn_forward.1']
    #allocation5 [shape = 'u8[98304]{0}', space=vmem, size = 0x18000, scoped, tag = 'input window, operand 3, single buffered']
    #allocation6 [shape = 's32[1]{0}', space=sflag, size = 0x4, scoped, tag = 'scoped memory for decoder_rnn_forward.1']
    %15 = vsyncpa [#allocation4], 0
    %16 = vsyncpa [#allocation6], 0
    // Predicated region
    $region2: #{decoder_rnn_forward.1} parent=1 // pred_check
      _
    $region3: #{decoder_rnn_forward.1} parent=1 // pred_check_branch
      %18 = sbr.rel (0) target = $region5
    $region4: #{decoder_rnn_forward.1} parent=1 // pred_region
      _
    $region5: #{decoder_rnn_forward.1} parent=1 // pred_fallthru
      _
    // Predicated region
    $region6: #{decoder_rnn_forward.1} parent=1 // pred_check
      _
    $region7: #{decoder_rnn_forward.1} parent=1 // pred_check_branch
      %20 = sbr.rel (0) target = $region9
    $region8: #{decoder_rnn_forward.1} parent=1 // pred_region
      _
    $region9: #{decoder_rnn_forward.1} parent=1 // pred_fallthru
      _
    // Predicated region
    $region10: #{decoder_rnn_forward.1} parent=1 // pred_check
      _
    $region11: #{decoder_rnn_forward.1} parent=1 // pred_check_branch
      %22 = sbr.rel (0) target = $region13
    $region12: #{decoder_rnn_forward.1} parent=1 // pred_region
      %s24 = ssub.s32 3072, 3072
      %25 = vsyncadd [#allocation4], %s24
      %s26 = sshll.u32 [#allocation3], 4
      %s27 = int_to_ptr.vmem [resolvable:$true] %s26
      %32 = dma.hbm_to_vmem [thread:$0]  %s2, 3072, %s27, [#allocation4], 192, 192, 12
    $region13: #{decoder_rnn_forward.1} parent=1 // pred_fallthru
      _
    // Predicated region
    $region14: #{decoder_rnn_forward.1} parent=1 // pred_check
      _
    $region15: #{decoder_rnn_forward.1} parent=1 // pred_check_branch
      %34 = sbr.rel (0) target = $region17
    $region16: #{decoder_rnn_forward.1} parent=1 // pred_region
      %s36 = ssub.s32 3072, 3072
      %37 = vsyncadd [#allocation6], %s36
      %s38 = sshll.u32 [#allocation5], 4
      %s39 = int_to_ptr.vmem [resolvable:$true] %s38
      %44 = dma.hbm_to_vmem [thread:$0]  %s3, 3072, %s39, [#allocation6], 192, 192, 12
    $region17: #{decoder_rnn_forward.1} parent=1 // pred_fallthru
      _
    // Predicated region
    $region18: #{decoder_rnn_forward.1} parent=1 // pred_check
      _
    $region19: #{decoder_rnn_forward.1} parent=1 // pred_check_branch
      %46 = sbr.rel (0) target = $region21
    $region20: #{decoder_rnn_forward.1} parent=1 // pred_region
      _
    $region21: #{decoder_rnn_forward.1} parent=1 // pred_fallthru
      _
    // Predicated region
    $region22: #{decoder_rnn_forward.1} parent=1 // pred_check
      _
    $region23: #{decoder_rnn_forward.1} parent=1 // pred_check_branch
      %48 = sbr.rel (0) target = $region25
    $region24: #{decoder_rnn_forward.1} parent=1 // pred_region
      _
    $region25: #{decoder_rnn_forward.1} parent=1 // pred_fallthru
      _
    // Predicated region
    $region26: #{decoder_rnn_forward.1} parent=1 // pred_check
      _
    $region27: #{decoder_rnn_forward.1} parent=1 // pred_check_branch
      %50 = sbr.rel (0) target = $region29
    $region28: #{decoder_rnn_forward.1} parent=1 // pred_region
      _
    $region29: #{decoder_rnn_forward.1} parent=1 // pred_fallthru
      _
    // Predicated region
    $region30: #{decoder_rnn_forward.1} parent=1 // pred_check
      _
    $region31: #{decoder_rnn_forward.1} parent=1 // pred_check_branch
      %52 = sbr.rel (0) target = $region33
    $region32: #{decoder_rnn_forward.1} parent=1 // pred_region
      _
    $region33: #{decoder_rnn_forward.1} parent=1 // pred_fallthru
      _
    // Predicated region
    $region34: #{decoder_rnn_forward.1} parent=1 // pred_check
      _
    $region35: #{decoder_rnn_forward.1} parent=1 // pred_check_branch
      %54 = sbr.rel (0) target = $region37
    $region36: #{decoder_rnn_forward.1} parent=1 // pred_region
      %55 = dma.done [#allocation4], 3072
    $region37: #{decoder_rnn_forward.1} parent=1 // pred_fallthru
      _
    // Predicated region
    $region38: #{decoder_rnn_forward.1} parent=1 // pred_check
      _
    $region39: #{decoder_rnn_forward.1} parent=1 // pred_check_branch
      %57 = sbr.rel (0) target = $region41
    $region40: #{decoder_rnn_forward.1} parent=1 // pred_region
      %58 = dma.done [#allocation6], 3072
    $region41: #{decoder_rnn_forward.1} parent=1 // pred_fallthru
      _
    %v60 = vld [vmem:[%s0] sm:$0xff]
    %v61 = vld [vmem:[%s0 + $0x8] sm:$0xff]
    %v62 = vld [vmem:[%s0 + $0x10] sm:$0xff]
    %v63 = vld [vmem:[%s0 + $0x18] sm:$0xff]
    %v64 = vld [vmem:[%s0 + $0x20] sm:$0xff]
    %v65 = vld [vmem:[%s0 + $0x28] sm:$0xff]
    %v66 = vld [vmem:[%s0 + $0x30] sm:$0xff]
    %v67 = vld [vmem:[%s0 + $0x38] sm:$0xff]
    %v68 = vmax.f32 %v60, 0.0
    %v69 = vmax.f32 %v61, 0.0
    %v70 = vmax.f32 %v62, 0.0
    %v71 = vmax.f32 %v63, 0.0
    %v72 = vmax.f32 %v64, 0.0
    %v73 = vmax.f32 %v65, 0.0
    %v74 = vmax.f32 %v66, 0.0
    %v75 = vmax.f32 %v67, 0.0
    %v76 = vpack.c.bf16 %v69, %v68
    %v77 = vpack.c.bf16 %v71, %v70
    %v78 = vpack.c.bf16 %v73, %v72
    %v79 = vpack.c.bf16 %v75, %v74
    %v80 = vld [vmem:[#allocation3] sm:$0xff]
    %v81 = vld [vmem:[#allocation3 + $0x8] sm:$0xf]
    %v82 = vld [vmem:[#allocation3 + $0xc] sm:$0xff]
    %v83 = vld [vmem:[#allocation3 + $0x14] sm:$0xf]
    %v84 = vld [vmem:[#allocation3 + $0x18] sm:$0xff]
    %v85 = vld [vmem:[#allocation3 + $0x20] sm:$0xf]
    %v86 = vld [vmem:[#allocation3 + $0x24] sm:$0xff]
    %v87 = vld [vmem:[#allocation3 + $0x2c] sm:$0xf]
    %v88 = vld [vmem:[#allocation3 + $0x30] sm:$0xff]
    %v89 = vld [vmem:[#allocation3 + $0x38] sm:$0xf]
    %v90 = vld [vmem:[#allocation3 + $0x3c] sm:$0xff]
    %v91 = vld [vmem:[#allocation3 + $0x44] sm:$0xf]
    %v92 = vld [vmem:[#allocation3 + $0x48] sm:$0xff]
    %v93 = vld [vmem:[#allocation3 + $0x50] sm:$0xf]
    %v94 = vld [vmem:[#allocation3 + $0x54] sm:$0xff]
    %v95 = vld [vmem:[#allocation3 + $0x5c] sm:$0xf]
    %v96 = vld [vmem:[#allocation3 + $0x60] sm:$0xff]
    %v97 = vld [vmem:[#allocation3 + $0x68] sm:$0xf]
    %v98 = vld [vmem:[#allocation3 + $0x6c] sm:$0xff]
    %v99 = vld [vmem:[#allocation3 + $0x74] sm:$0xf]
    %v100 = vld [vmem:[#allocation3 + $0x78] sm:$0xff]
    %v101 = vld [vmem:[#allocation3 + $0x80] sm:$0xf]
    %v102 = vld [vmem:[#allocation3 + $0x84] sm:$0xff]
    %v103 = vld [vmem:[#allocation3 + $0x8c] sm:$0xf]
    %v104 = vld [vmem:[#allocation3 + $0x90] sm:$0xff]
    %v105 = vld [vmem:[#allocation3 + $0x98] sm:$0xf]
    %v106 = vld [vmem:[#allocation3 + $0x9c] sm:$0xff]
    %v107 = vld [vmem:[#allocation3 + $0xa4] sm:$0xf]
    %v108 = vld [vmem:[#allocation3 + $0xa8] sm:$0xff]
    %v109 = vld [vmem:[#allocation3 + $0xb0] sm:$0xf]
    %v110 = vld [vmem:[#allocation3 + $0xb4] sm:$0xff]
    %v111 = vld [vmem:[#allocation3 + $0xbc] sm:$0xf]
    %v112 = vld [vmem:[%s4] sm:$0x7]
    %v114 = vlaneseq
    %v115 = vshrl.u32 %v114, 7
    %v116 = vsub.s32 0, %v115
    %v117 = vrot.slane %v112, %v116
    %v118 = vlaneseq
    %v119 = vshrl.u32 %v118, 7
    %v120 = vsub.s32 1, %v119
    %v121 = vrot.slane %v112, %v120
    %v122 = vlaneseq
    %v123 = vshrl.u32 %v122, 7
    %v124 = vsub.s32 2, %v123
    %v125 = vrot.slane %v112, %v124
    %v161 = vunpack.c.l.b16 %v80
    %v162 = vunpack.c.h.b16 %v80
    %v163 = vunpack.c.l.b16 %v81
    %v164 = vunpack.c.l.b16 %v82
    %v165 = vunpack.c.h.b16 %v82
    %v166 = vunpack.c.l.b16 %v83
    %v167 = vunpack.c.l.b16 %v84
    %v168 = vunpack.c.h.b16 %v84
    %v169 = vunpack.c.l.b16 %v85
    %v170 = vunpack.c.l.b16 %v86
    %v171 = vunpack.c.h.b16 %v86
    %v172 = vunpack.c.l.b16 %v87
    %v173 = vunpack.c.l.b16 %v88
    %v174 = vunpack.c.h.b16 %v88
    %v175 = vunpack.c.l.b16 %v89
    %v176 = vunpack.c.l.b16 %v90
    %v177 = vunpack.c.h.b16 %v90
    %v178 = vunpack.c.l.b16 %v91
    %v179 = vunpack.c.l.b16 %v92
    %v180 = vunpack.c.h.b16 %v92
    %v181 = vunpack.c.l.b16 %v93
    %v182 = vunpack.c.l.b16 %v94
    %v183 = vunpack.c.h.b16 %v94
    %v184 = vunpack.c.l.b16 %v95
    %v185 = vunpack.c.l.b16 %v96
    %v186 = vunpack.c.h.b16 %v96
    %v187 = vunpack.c.l.b16 %v97
    %v188 = vunpack.c.l.b16 %v98
    %v189 = vunpack.c.h.b16 %v98
    %v190 = vunpack.c.l.b16 %v99
    %v191 = vunpack.c.l.b16 %v100
    %v192 = vunpack.c.h.b16 %v100
    %v193 = vunpack.c.l.b16 %v101
    %v194 = vunpack.c.l.b16 %v102
    %v195 = vunpack.c.h.b16 %v102
    %v196 = vunpack.c.l.b16 %v103
    %v197 = vunpack.c.l.b16 %v104
    %v198 = vunpack.c.h.b16 %v104
    %v199 = vunpack.c.l.b16 %v105
    %v200 = vunpack.c.l.b16 %v106
    %v201 = vunpack.c.h.b16 %v106
    %v202 = vunpack.c.l.b16 %v107
    %v203 = vunpack.c.l.b16 %v108
    %v204 = vunpack.c.h.b16 %v108
    %v205 = vunpack.c.l.b16 %v109
    %v206 = vunpack.c.l.b16 %v110
    %v207 = vunpack.c.h.b16 %v110
    %v208 = vunpack.c.l.b16 %v111
    %v209 = vpack.c.b16 %v164, %v161
    %v210 = vpack.c.b16 %v165, %v162
    %v211 = vpack.c.b16 %v166, %v163
    %v212 = vpack.c.b16 %v170, %v167
    %v213 = vpack.c.b16 %v171, %v168
    %v214 = vpack.c.b16 %v172, %v169
    %v215 = vpack.c.b16 %v176, %v173
    %v216 = vpack.c.b16 %v177, %v174
    %v217 = vpack.c.b16 %v178, %v175
    %v218 = vpack.c.b16 %v182, %v179
    %v219 = vpack.c.b16 %v183, %v180
    %v220 = vpack.c.b16 %v184, %v181
    %v221 = vpack.c.b16 %v188, %v185
    %v222 = vpack.c.b16 %v189, %v186
    %v223 = vpack.c.b16 %v190, %v187
    %v224 = vpack.c.b16 %v194, %v191
    %v225 = vpack.c.b16 %v195, %v192
    %v226 = vpack.c.b16 %v196, %v193
    %v227 = vpack.c.b16 %v200, %v197
    %v228 = vpack.c.b16 %v201, %v198
    %v229 = vpack.c.b16 %v202, %v199
    %v230 = vpack.c.b16 %v206, %v203
    %v231 = vpack.c.b16 %v207, %v204
    %v232 = vpack.c.b16 %v208, %v205
    %257 = vmatprep.subr.bf16.mxu0 %v210
    %258 = vmatpush1.bf16.msra.mxu0 %v209
    %259 = vmatprep.subr.bf16.mxu0 %v213
    %260 = vmatpush1.bf16.msra.mxu0 %v212
    %261 = vmatprep.subr.bf16.mxu0 %v216
    %262 = vmatpush1.bf16.msra.mxu0 %v215
    %263 = vmatprep.subr.bf16.mxu0 %v219
    %264 = vmatpush1.bf16.msra.mxu0 %v218
    %265 = vmatprep.subr.bf16.mxu0 %v222
    %266 = vmatpush1.bf16.msra.mxu0 %v221
    %267 = vmatprep.subr.bf16.mxu0 %v225
    %268 = vmatpush1.bf16.msra.mxu0 %v224
    %269 = vmatprep.subr.bf16.mxu0 %v228
    %270 = vmatpush1.bf16.msra.mxu0 %v227
    %271 = vmatprep.subr.bf16.mxu0 %v231
    %272 = vmatpush1.bf16.msra.mxu0 %v230
    %273 = vmatprep.subr.bf16.mxu0 0
    %274 = vmatpush1.bf16.msra.mxu0 0
    %275 = vmatprep.subr.bf16.mxu0 0
    %276 = vmatpush1.bf16.msra.mxu0 0
    %277 = vmatprep.subr.bf16.mxu0 0
    %278 = vmatpush1.bf16.msra.mxu0 0
    %279 = vmatprep.subr.bf16.mxu0 0
    %280 = vmatpush1.bf16.msra.mxu0 0
    %281 = vmatprep.subr.bf16.mxu0 0
    %282 = vmatpush1.bf16.msra.mxu0 0
    %283 = vmatprep.subr.bf16.mxu0 0
    %284 = vmatpush1.bf16.msra.mxu0 0
    %285 = vmatprep.subr.bf16.mxu0 0
    %286 = vmatpush1.bf16.msra.mxu0 0
    %287 = vmatprep.subr.bf16.mxu0 0
    %288 = vmatpush1.bf16.msra.mxu0 0
    %289 = vmatprep.mubr.bf16.mxu0 0
    %290 = vmatmul.mubr.bf16.gmra.mrb[0].mxu0 %v76
    %v291 = vpop.f32.mrb[0].mxu0
    %v292 = vadd.f32 %v117, %v291
    %v293 = vpop.f32.mrb[0].mxu0
    %v294 = vadd.f32 %v121, %v293
    %v295 = vpop.f32.mrb[0].mxu0
    %v296 = vadd.f32 %v117, %v295
    %v297 = vpop.f32.mrb[0].mxu0
    %v298 = vadd.f32 %v121, %v297
    %299 = vmatprep.mubr.bf16.mxu0 0
    %300 = vmatmul.mubr.bf16.gmra.mrb[0].mxu0 %v77
    %v301 = vpop.f32.mrb[0].mxu0
    %v302 = vadd.f32 %v117, %v301
    %v303 = vpop.f32.mrb[0].mxu0
    %v304 = vadd.f32 %v121, %v303
    %v305 = vpop.f32.mrb[0].mxu0
    %v306 = vadd.f32 %v117, %v305
    %v307 = vpop.f32.mrb[0].mxu0
    %v308 = vadd.f32 %v121, %v307
    %309 = vmatprep.mubr.bf16.mxu0 0
    %310 = vmatmul.mubr.bf16.gmra.mrb[0].mxu0 %v78
    %v311 = vpop.f32.mrb[0].mxu0
    %v312 = vadd.f32 %v117, %v311
    %v313 = vpop.f32.mrb[0].mxu0
    %v314 = vadd.f32 %v121, %v313
    %v315 = vpop.f32.mrb[0].mxu0
    %v316 = vadd.f32 %v117, %v315
    %v317 = vpop.f32.mrb[0].mxu0
    %v318 = vadd.f32 %v121, %v317
    %319 = vmatprep.mubr.bf16.mxu0 0
    %320 = vmatmul.mubr.bf16.gmra.mrb[0].mxu0 %v79
    %v321 = vpop.f32.mrb[0].mxu0
    %v322 = vadd.f32 %v117, %v321
    %v323 = vpop.f32.mrb[0].mxu0
    %v324 = vadd.f32 %v121, %v323
    %v325 = vpop.f32.mrb[0].mxu0
    %v326 = vadd.f32 %v117, %v325
    %v327 = vpop.f32.mrb[0].mxu0
    %v328 = vadd.f32 %v121, %v327
    %329 = vdwg.mxu0
    %330 = vmatprep.subr.bf16.mxu0 0
    %331 = vmatpush1.bf16.msra.mxu0 %v211
    %332 = vmatprep.subr.bf16.mxu0 0
    %333 = vmatpush1.bf16.msra.mxu0 %v214
    %334 = vmatprep.subr.bf16.mxu0 0
    %335 = vmatpush1.bf16.msra.mxu0 %v217
    %336 = vmatprep.subr.bf16.mxu0 0
    %337 = vmatpush1.bf16.msra.mxu0 %v220
    %338 = vmatprep.subr.bf16.mxu0 0
    %339 = vmatpush1.bf16.msra.mxu0 %v223
    %340 = vmatprep.subr.bf16.mxu0 0
    %341 = vmatpush1.bf16.msra.mxu0 %v226
    %342 = vmatprep.subr.bf16.mxu0 0
    %343 = vmatpush1.bf16.msra.mxu0 %v229
    %344 = vmatprep.subr.bf16.mxu0 0
    %345 = vmatpush1.bf16.msra.mxu0 %v232
    %346 = vmatprep.subr.bf16.mxu0 0
    %347 = vmatpush1.bf16.msra.mxu0 0
    %348 = vmatprep.subr.bf16.mxu0 0
    %349 = vmatpush1.bf16.msra.mxu0 0
    %350 = vmatprep.subr.bf16.mxu0 0
    %351 = vmatpush1.bf16.msra.mxu0 0
    %352 = vmatprep.subr.bf16.mxu0 0
    %353 = vmatpush1.bf16.msra.mxu0 0
    %354 = vmatprep.subr.bf16.mxu0 0
    %355 = vmatpush1.bf16.msra.mxu0 0
    %356 = vmatprep.subr.bf16.mxu0 0
    %357 = vmatpush1.bf16.msra.mxu0 0
    %358 = vmatprep.subr.bf16.mxu0 0
    %359 = vmatpush1.bf16.msra.mxu0 0
    %360 = vmatprep.subr.bf16.mxu0 0
    %361 = vmatpush1.bf16.msra.mxu0 0
    %362 = vmatprep.mubr.bf16.mxu0 0
    %363 = vmatmul.mubr.bf16.gmra.mrb[0].mxu0 %v76
    %v364 = vpop.f32.mrb[0].mxu0
    %v365 = vadd.f32 %v125, %v364
    %v366 = vpop.f32.mrb[0].mxu0
    %v367 = vpop.f32.mrb[0].mxu0
    %v368 = vadd.f32 %v125, %v367
    %v369 = vpop.f32.mrb[0].mxu0
    %370 = vmatprep.mubr.bf16.mxu0 0
    %371 = vmatmul.mubr.bf16.gmra.mrb[0].mxu0 %v77
    %v372 = vpop.f32.mrb[0].mxu0
    %v373 = vadd.f32 %v125, %v372
    %v374 = vpop.f32.mrb[0].mxu0
    %v375 = vpop.f32.mrb[0].mxu0
    %v376 = vadd.f32 %v125, %v375
    %v377 = vpop.f32.mrb[0].mxu0
    %378 = vmatprep.mubr.bf16.mxu0 0
    %379 = vmatmul.mubr.bf16.gmra.mrb[0].mxu0 %v78
    %v380 = vpop.f32.mrb[0].mxu0
    %v381 = vadd.f32 %v125, %v380
    %v382 = vpop.f32.mrb[0].mxu0
    %v383 = vpop.f32.mrb[0].mxu0
    %v384 = vadd.f32 %v125, %v383
    %v385 = vpop.f32.mrb[0].mxu0
    %386 = vmatprep.mubr.bf16.mxu0 0
    %387 = vmatmul.mubr.bf16.gmra.mrb[0].mxu0 %v79
    %v388 = vpop.f32.mrb[0].mxu0
    %v389 = vadd.f32 %v125, %v388
    %v390 = vpop.f32.mrb[0].mxu0
    %v391 = vpop.f32.mrb[0].mxu0
    %v392 = vadd.f32 %v125, %v391
    %v393 = vpop.f32.mrb[0].mxu0
    %394 = vdwg.mxu0
    %395 = vst [vmem:[#allocation2] sm:$0xff] %v292
    %396 = vst [vmem:[#allocation2 + $0x8] sm:$0xff] %v294
    %397 = vst [vmem:[#allocation2 + $0x10] sm:$0xff] %v365
    %s398 = scalar_lea.vmem [#allocation2], 24
    %399 = vst [vmem:[%s398] sm:$0xff] %v296
    %400 = vst [vmem:[%s398 + $0x8] sm:$0xff] %v298
    %401 = vst [vmem:[%s398 + $0x10] sm:$0xff] %v368
    %s402 = scalar_lea.vmem [#allocation2], 48
    %403 = vst [vmem:[%s402] sm:$0xff] %v302
    %404 = vst [vmem:[%s402 + $0x8] sm:$0xff] %v304
    %405 = vst [vmem:[%s402 + $0x10] sm:$0xff] %v373
    %s406 = scalar_lea.vmem [#allocation2], 72
    %407 = vst [vmem:[%s406] sm:$0xff] %v306
    %408 = vst [vmem:[%s406 + $0x8] sm:$0xff] %v308
    %409 = vst [vmem:[%s406 + $0x10] sm:$0xff] %v376
    %s410 = scalar_lea.vmem [#allocation2], 96
    %411 = vst [vmem:[%s410] sm:$0xff] %v312
    %412 = vst [vmem:[%s410 + $0x8] sm:$0xff] %v314
    %413 = vst [vmem:[%s410 + $0x10] sm:$0xff] %v381
    %s414 = scalar_lea.vmem [#allocation2], 120
    %415 = vst [vmem:[%s414] sm:$0xff] %v316
    %416 = vst [vmem:[%s414 + $0x8] sm:$0xff] %v318
    %417 = vst [vmem:[%s414 + $0x10] sm:$0xff] %v384
    %s418 = scalar_lea.vmem [#allocation2], 144
    %419 = vst [vmem:[%s418] sm:$0xff] %v322
    %420 = vst [vmem:[%s418 + $0x8] sm:$0xff] %v324
    %421 = vst [vmem:[%s418 + $0x10] sm:$0xff] %v389
    %s422 = scalar_lea.vmem [#allocation2], 168
    %423 = vst [vmem:[%s422] sm:$0xff] %v326
    %424 = vst [vmem:[%s422 + $0x8] sm:$0xff] %v328
    %425 = vst [vmem:[%s422 + $0x10] sm:$0xff] %v392
    %v426 = vld [vmem:[%s1] sm:$0xff]
    %v427 = vld [vmem:[#allocation2] sm:$0xff]
    %v428 = vld [vmem:[#allocation2 + $0x8] sm:$0xff]
    %v429 = vld [vmem:[#allocation2 + $0x10] sm:$0xff]
    %v430 = vpack.c.bf16 %v426, %v426
    %v431 = vld [vmem:[#allocation5] sm:$0xff]
    %v432 = vld [vmem:[#allocation5 + $0x8] sm:$0xf]
    %v433 = vld [vmem:[#allocation5 + $0xc] sm:$0xff]
    %v434 = vld [vmem:[#allocation5 + $0x14] sm:$0xf]
    %v435 = vld [vmem:[#allocation5 + $0x18] sm:$0xff]
    %v436 = vld [vmem:[#allocation5 + $0x20] sm:$0xf]
    %v437 = vld [vmem:[#allocation5 + $0x24] sm:$0xff]
    %v438 = vld [vmem:[#allocation5 + $0x2c] sm:$0xf]
    %v439 = vld [vmem:[#allocation5 + $0x30] sm:$0xff]
    %v440 = vld [vmem:[#allocation5 + $0x38] sm:$0xf]
    %v441 = vld [vmem:[#allocation5 + $0x3c] sm:$0xff]
    %v442 = vld [vmem:[#allocation5 + $0x44] sm:$0xf]
    %v443 = vld [vmem:[#allocation5 + $0x48] sm:$0xff]
    %v444 = vld [vmem:[#allocation5 + $0x50] sm:$0xf]
    %v445 = vld [vmem:[#allocation5 + $0x54] sm:$0xff]
    %v446 = vld [vmem:[#allocation5 + $0x5c] sm:$0xf]
    %v447 = vld [vmem:[#allocation5 + $0x60] sm:$0xff]
    %v448 = vld [vmem:[#allocation5 + $0x68] sm:$0xf]
    %v449 = vld [vmem:[#allocation5 + $0x6c] sm:$0xff]
    %v450 = vld [vmem:[#allocation5 + $0x74] sm:$0xf]
    %v451 = vld [vmem:[#allocation5 + $0x78] sm:$0xff]
    %v452 = vld [vmem:[#allocation5 + $0x80] sm:$0xf]
    %v453 = vld [vmem:[#allocation5 + $0x84] sm:$0xff]
    %v454 = vld [vmem:[#allocation5 + $0x8c] sm:$0xf]
    %v455 = vld [vmem:[#allocation5 + $0x90] sm:$0xff]
    %v456 = vld [vmem:[#allocation5 + $0x98] sm:$0xf]
    %v457 = vld [vmem:[#allocation5 + $0x9c] sm:$0xff]
    %v458 = vld [vmem:[#allocation5 + $0xa4] sm:$0xf]
    %v459 = vld [vmem:[#allocation5 + $0xa8] sm:$0xff]
    %v460 = vld [vmem:[#allocation5 + $0xb0] sm:$0xf]
    %v461 = vld [vmem:[#allocation5 + $0xb4] sm:$0xff]
    %v462 = vld [vmem:[#allocation5 + $0xbc] sm:$0xf]
    %v463 = vld [vmem:[%s5] sm:$0x7]
    %v465 = vlaneseq
    %v466 = vshrl.u32 %v465, 7
    %v467 = vsub.s32 0, %v466
    %v468 = vrot.slane %v463, %v467
    %v469 = vlaneseq
    %v470 = vshrl.u32 %v469, 7
    %v471 = vsub.s32 1, %v470
    %v472 = vrot.slane %v463, %v471
    %v473 = vlaneseq
    %v474 = vshrl.u32 %v473, 7
    %v475 = vsub.s32 2, %v474
    %v476 = vrot.slane %v463, %v475
    %v512 = vunpack.c.l.b16 %v431
    %v513 = vunpack.c.h.b16 %v431
    %v514 = vunpack.c.l.b16 %v432
    %v515 = vunpack.c.l.b16 %v433
    %v516 = vunpack.c.h.b16 %v433
    %v517 = vunpack.c.l.b16 %v434
    %v518 = vunpack.c.l.b16 %v435
    %v519 = vunpack.c.h.b16 %v435
    %v520 = vunpack.c.l.b16 %v436
    %v521 = vunpack.c.l.b16 %v437
    %v522 = vunpack.c.h.b16 %v437
    %v523 = vunpack.c.l.b16 %v438
    %v524 = vunpack.c.l.b16 %v439
    %v525 = vunpack.c.h.b16 %v439
    %v526 = vunpack.c.l.b16 %v440
    %v527 = vunpack.c.l.b16 %v441
    %v528 = vunpack.c.h.b16 %v441
    %v529 = vunpack.c.l.b16 %v442
    %v530 = vunpack.c.l.b16 %v443
    %v531 = vunpack.c.h.b16 %v443
    %v532 = vunpack.c.l.b16 %v444
    %v533 = vunpack.c.l.b16 %v445
    %v534 = vunpack.c.h.b16 %v445
    %v535 = vunpack.c.l.b16 %v446
    %v536 = vunpack.c.l.b16 %v447
    %v537 = vunpack.c.h.b16 %v447
    %v538 = vunpack.c.l.b16 %v448
    %v539 = vunpack.c.l.b16 %v449
    %v540 = vunpack.c.h.b16 %v449
    %v541 = vunpack.c.l.b16 %v450
    %v542 = vunpack.c.l.b16 %v451
    %v543 = vunpack.c.h.b16 %v451
    %v544 = vunpack.c.l.b16 %v452
    %v545 = vunpack.c.l.b16 %v453
    %v546 = vunpack.c.h.b16 %v453
    %v547 = vunpack.c.l.b16 %v454
    %v548 = vunpack.c.l.b16 %v455
    %v549 = vunpack.c.h.b16 %v455
    %v550 = vunpack.c.l.b16 %v456
    %v551 = vunpack.c.l.b16 %v457
    %v552 = vunpack.c.h.b16 %v457
    %v553 = vunpack.c.l.b16 %v458
    %v554 = vunpack.c.l.b16 %v459
    %v555 = vunpack.c.h.b16 %v459
    %v556 = vunpack.c.l.b16 %v460
    %v557 = vunpack.c.l.b16 %v461
    %v558 = vunpack.c.h.b16 %v461
    %v559 = vunpack.c.l.b16 %v462
    %v560 = vpack.c.b16 %v515, %v512
    %v561 = vpack.c.b16 %v516, %v513
    %v562 = vpack.c.b16 %v517, %v514
    %v563 = vpack.c.b16 %v521, %v518
    %v564 = vpack.c.b16 %v522, %v519
    %v565 = vpack.c.b16 %v523, %v520
    %v566 = vpack.c.b16 %v527, %v524
    %v567 = vpack.c.b16 %v528, %v525
    %v568 = vpack.c.b16 %v529, %v526
    %v569 = vpack.c.b16 %v533, %v530
    %v570 = vpack.c.b16 %v534, %v531
    %v571 = vpack.c.b16 %v535, %v532
    %v572 = vpack.c.b16 %v539, %v536
    %v573 = vpack.c.b16 %v540, %v537
    %v574 = vpack.c.b16 %v541, %v538
    %v575 = vpack.c.b16 %v545, %v542
    %v576 = vpack.c.b16 %v546, %v543
    %v577 = vpack.c.b16 %v547, %v544
    %v578 = vpack.c.b16 %v551, %v548
    %v579 = vpack.c.b16 %v552, %v549
    %v580 = vpack.c.b16 %v553, %v550
    %v581 = vpack.c.b16 %v557, %v554
    %v582 = vpack.c.b16 %v558, %v555
    %v583 = vpack.c.b16 %v559, %v556
    %608 = vmatprep.subr.bf16.mxu0 %v561
    %609 = vmatpush1.bf16.msra.mxu0 %v560
    %610 = vmatprep.subr.bf16.mxu0 %v564
    %611 = vmatpush1.bf16.msra.mxu0 %v563
    %612 = vmatprep.subr.bf16.mxu0 %v567
    %613 = vmatpush1.bf16.msra.mxu0 %v566
    %614 = vmatprep.subr.bf16.mxu0 %v570
    %615 = vmatpush1.bf16.msra.mxu0 %v569
    %616 = vmatprep.subr.bf16.mxu0 %v573
    %617 = vmatpush1.bf16.msra.mxu0 %v572
    %618 = vmatprep.subr.bf16.mxu0 %v576
    %619 = vmatpush1.bf16.msra.mxu0 %v575
    %620 = vmatprep.subr.bf16.mxu0 %v579
    %621 = vmatpush1.bf16.msra.mxu0 %v578
    %622 = vmatprep.subr.bf16.mxu0 %v582
    %623 = vmatpush1.bf16.msra.mxu0 %v581
    %624 = vmatprep.subr.bf16.mxu0 0
    %625 = vmatpush1.bf16.msra.mxu0 0
    %626 = vmatprep.subr.bf16.mxu0 0
    %627 = vmatpush1.bf16.msra.mxu0 0
    %628 = vmatprep.subr.bf16.mxu0 0
    %629 = vmatpush1.bf16.msra.mxu0 0
    %630 = vmatprep.subr.bf16.mxu0 0
    %631 = vmatpush1.bf16.msra.mxu0 0
    %632 = vmatprep.subr.bf16.mxu0 0
    %633 = vmatpush1.bf16.msra.mxu0 0
    %634 = vmatprep.subr.bf16.mxu0 0
    %635 = vmatpush1.bf16.msra.mxu0 0
    %636 = vmatprep.subr.bf16.mxu0 0
    %637 = vmatpush1.bf16.msra.mxu0 0
    %638 = vmatprep.subr.bf16.mxu0 0
    %639 = vmatpush1.bf16.msra.mxu0 0
    %640 = vmatprep.mubr.bf16.mxu0 0
    %641 = vmatmul.mubr.bf16.gmra.mrb[0].mxu0 %v430
    %v642 = vpop.f32.mrb[0].mxu0
    %v643 = vadd.f32 %v468, %v642
    %v644 = vpop.f32.mrb[0].mxu0
    %v645 = vadd.f32 %v472, %v644
    %v646 = vpop.f32.mrb[0].mxu0
    %v647 = vpop.f32.mrb[0].mxu0
    %648 = vdwg.mxu0
    %649 = vmatprep.subr.bf16.mxu0 0
    %650 = vmatpush1.bf16.msra.mxu0 %v562
    %651 = vmatprep.subr.bf16.mxu0 0
    %652 = vmatpush1.bf16.msra.mxu0 %v565
    %653 = vmatprep.subr.bf16.mxu0 0
    %654 = vmatpush1.bf16.msra.mxu0 %v568
    %655 = vmatprep.subr.bf16.mxu0 0
    %656 = vmatpush1.bf16.msra.mxu0 %v571
    %657 = vmatprep.subr.bf16.mxu0 0
    %658 = vmatpush1.bf16.msra.mxu0 %v574
    %659 = vmatprep.subr.bf16.mxu0 0
    %660 = vmatpush1.bf16.msra.mxu0 %v577
    %661 = vmatprep.subr.bf16.mxu0 0
    %662 = vmatpush1.bf16.msra.mxu0 %v580
    %663 = vmatprep.subr.bf16.mxu0 0
    %664 = vmatpush1.bf16.msra.mxu0 %v583
    %665 = vmatprep.subr.bf16.mxu0 0
    %666 = vmatpush1.bf16.msra.mxu0 0
    %667 = vmatprep.subr.bf16.mxu0 0
    %668 = vmatpush1.bf16.msra.mxu0 0
    %669 = vmatprep.subr.bf16.mxu0 0
    %670 = vmatpush1.bf16.msra.mxu0 0
    %671 = vmatprep.subr.bf16.mxu0 0
    %672 = vmatpush1.bf16.msra.mxu0 0
    %673 = vmatprep.subr.bf16.mxu0 0
    %674 = vmatpush1.bf16.msra.mxu0 0
    %675 = vmatprep.subr.bf16.mxu0 0
    %676 = vmatpush1.bf16.msra.mxu0 0
    %677 = vmatprep.subr.bf16.mxu0 0
    %678 = vmatpush1.bf16.msra.mxu0 0
    %679 = vmatprep.subr.bf16.mxu0 0
    %680 = vmatpush1.bf16.msra.mxu0 0
    %681 = vmatprep.mubr.bf16.mxu0 0
    %682 = vmatmul.mubr.bf16.gmra.mrb[0].mxu0 %v430
    %v683 = vpop.f32.mrb[0].mxu0
    %v684 = vadd.f32 %v476, %v683
    %v685 = vpop.f32.mrb[0].mxu0
    %v686 = vpop.f32.mrb[0].mxu0
    %v687 = vpop.f32.mrb[0].mxu0
    %688 = vdwg.mxu0
    %v689 = vadd.f32 %v427, %v643
    %v690 = vxor.u32 %v689, 2147483648
    %v691 = vmul.f32 %v690, 1.442695
    %v692 = vpow.pop %v691
    %v693 = vadd.f32 %v692, 1.0
    %v694 = vrcp.pop %v693
    %v695 = vmul.f32 1.0, %v694
    %v696 = vadd.f32 %v428, %v645
    %v697 = vxor.u32 %v696, 2147483648
    %v698 = vmul.f32 %v697, 1.442695
    %v699 = vpow.pop %v698
    %v700 = vadd.f32 %v699, 1.0
    %v701 = vrcp.pop %v700
    %v702 = vmul.f32 1.0, %v701
    %v703 = vmul.f32 %v695, %v684
    %v704 = vadd.f32 %v429, %v703
    %v705 = vtanh.pop %v704
    %v706 = vsub.f32 1.0, %v702
    %v707 = vmul.f32 %v706, %v705
    %v708 = vmul.f32 %v702, %v426
    %v709 = vadd.f32 %v707, %v708
    %v710 = vpack.c.bf16 %v709, %v709
    %v711 = vld [vmem:[%s6] sm:$0xf]
    %v712 = vld [vmem:[%s6 + $0x4] sm:$0xf]
    %v713 = vld [vmem:[%s6 + $0x8] sm:$0xf]
    %v714 = vld [vmem:[%s6 + $0xc] sm:$0xf]
    %v715 = vld [vmem:[%s6 + $0x10] sm:$0xf]
    %v716 = vld [vmem:[%s6 + $0x14] sm:$0xf]
    %v717 = vld [vmem:[%s6 + $0x18] sm:$0xf]
    %v718 = vld [vmem:[%s6 + $0x1c] sm:$0xf]
    %v719 = vld [vmem:[%s6 + $0x20] sm:$0xf]
    %v720 = vld [vmem:[%s6 + $0x24] sm:$0xf]
    %v721 = vld [vmem:[%s6 + $0x28] sm:$0xf]
    %v722 = vld [vmem:[%s6 + $0x2c] sm:$0xf]
    %v723 = vld [vmem:[%s6 + $0x30] sm:$0xf]
    %v724 = vld [vmem:[%s6 + $0x34] sm:$0xf]
    %v725 = vld [vmem:[%s6 + $0x38] sm:$0xf]
    %v726 = vld [vmem:[%s6 + $0x3c] sm:$0xf]
    %v727 = vld [vmem:[%s7] sm:$0x1]
    %v729 = vlaneseq
    %v730 = vshrl.u32 %v729, 7
    %v731 = vsub.s32 0, %v730
    %v732 = vrot.slane %v727, %v731
    %v750 = vunpack.c.l.b16 %v711
    %v751 = vunpack.c.l.b16 %v712
    %v752 = vunpack.c.l.b16 %v713
    %v753 = vunpack.c.l.b16 %v714
    %v754 = vunpack.c.l.b16 %v715
    %v755 = vunpack.c.l.b16 %v716
    %v756 = vunpack.c.l.b16 %v717
    %v757 = vunpack.c.l.b16 %v718
    %v758 = vunpack.c.l.b16 %v719
    %v759 = vunpack.c.l.b16 %v720
    %v760 = vunpack.c.l.b16 %v721
    %v761 = vunpack.c.l.b16 %v722
    %v762 = vunpack.c.l.b16 %v723
    %v763 = vunpack.c.l.b16 %v724
    %v764 = vunpack.c.l.b16 %v725
    %v765 = vunpack.c.l.b16 %v726
    %v766 = vpack.c.b16 %v751, %v750
    %v767 = vpack.c.b16 %v753, %v752
    %v768 = vpack.c.b16 %v755, %v754
    %v769 = vpack.c.b16 %v757, %v756
    %v770 = vpack.c.b16 %v759, %v758
    %v771 = vpack.c.b16 %v761, %v760
    %v772 = vpack.c.b16 %v763, %v762
    %v773 = vpack.c.b16 %v765, %v764
    %782 = vmatprep.subr.bf16.mxu0 0
    %783 = vmatpush1.bf16.msra.mxu0 %v766
    %784 = vmatprep.subr.bf16.mxu0 0
    %785 = vmatpush1.bf16.msra.mxu0 %v767
    %786 = vmatprep.subr.bf16.mxu0 0
    %787 = vmatpush1.bf16.msra.mxu0 %v768
    %788 = vmatprep.subr.bf16.mxu0 0
    %789 = vmatpush1.bf16.msra.mxu0 %v769
    %790 = vmatprep.subr.bf16.mxu0 0
    %791 = vmatpush1.bf16.msra.mxu0 %v770
    %792 = vmatprep.subr.bf16.mxu0 0
    %793 = vmatpush1.bf16.msra.mxu0 %v771
    %794 = vmatprep.subr.bf16.mxu0 0
    %795 = vmatpush1.bf16.msra.mxu0 %v772
    %796 = vmatprep.subr.bf16.mxu0 0
    %797 = vmatpush1.bf16.msra.mxu0 %v773
    %798 = vmatprep.subr.bf16.mxu0 0
    %799 = vmatpush1.bf16.msra.mxu0 0
    %800 = vmatprep.subr.bf16.mxu0 0
    %801 = vmatpush1.bf16.msra.mxu0 0
    %802 = vmatprep.subr.bf16.mxu0 0
    %803 = vmatpush1.bf16.msra.mxu0 0
    %804 = vmatprep.subr.bf16.mxu0 0
    %805 = vmatpush1.bf16.msra.mxu0 0
    %806 = vmatprep.subr.bf16.mxu0 0
    %807 = vmatpush1.bf16.msra.mxu0 0
    %808 = vmatprep.subr.bf16.mxu0 0
    %809 = vmatpush1.bf16.msra.mxu0 0
    %810 = vmatprep.subr.bf16.mxu0 0
    %811 = vmatpush1.bf16.msra.mxu0 0
    %812 = vmatprep.subr.bf16.mxu0 0
    %813 = vmatpush1.bf16.msra.mxu0 0
    %814 = vmatprep.mubr.bf16.mxu0 0
    %815 = vmatmul.mubr.bf16.gmra.mrb[0].mxu0 %v710
    %v816 = vpop.f32.mrb[0].mxu0
    %v817 = vadd.f32 %v732, %v816
    %v818 = vpop.f32.mrb[0].mxu0
    %v819 = vpop.f32.mrb[0].mxu0
    %v820 = vpop.f32.mrb[0].mxu0
    %821 = vdwg.mxu0
    %v822 = vlaneseq
    %v823 = vand.u32 %v822, 127
    %vm824 = vcmp.lt.s32.totalorder %v823, 64
    %v825 = vsel %vm824, 1, 0
    %vm826 = vcmp.eq.s32.totalorder %v825, 1
    %v827 = vsel %vm826, %v817, -1e+30
    %828 = vmax.xlane.f32.xlu0 %v827
    %v829 = vpop.xlane.xlu0 %828
    %v830 = vsub.f32 %v827, %v829
    %v831 = vmul.f32 %v830, 1.442695
    %v832 = vpow.pop %v831
    %v833 = vsel %vm826, %v832, 0.0
    %834 = vadd.xlane.f32.xlu0 %v833
    %v835 = vpop.xlane.xlu0 %834
    %v836 = vlog2.pop %v835
    %v837 = vmul.f32 %v836, 0.6931472
    %v838 = vsub.f32 %v830, %v837
    %839 = vst [vmem:[%s8] sm:$0xff] %v838
    %v840 = vld [vmem:[%s398] sm:$0xff]
    %v841 = vld [vmem:[%s398 + $0x8] sm:$0xff]
    %v842 = vld [vmem:[%s398 + $0x10] sm:$0xff]
    %v843 = vld [vmem:[#allocation5] sm:$0xff]
    %v844 = vld [vmem:[#allocation5 + $0x8] sm:$0xf]
    %v845 = vld [vmem:[#allocation5 + $0xc] sm:$0xff]
    %v846 = vld [vmem:[#allocation5 + $0x14] sm:$0xf]
    %v847 = vld [vmem:[#allocation5 + $0x18] sm:$0xff]
    %v848 = vld [vmem:[#allocation5 + $0x20] sm:$0xf]
    %v849 = vld [vmem:[#allocation5 + $0x24] sm:$0xff]
    %v850 = vld [vmem:[#allocation5 + $0x2c] sm:$0xf]
    %v851 = vld [vmem:[#allocation5 + $0x30] sm:$0xff]
    %v852 = vld [vmem:[#allocation5 + $0x38] sm:$0xf]
    %v853 = vld [vmem:[#allocation5 + $0x3c] sm:$0xff]
    %v854 = vld [vmem:[#allocation5 + $0x44] sm:$0xf]
    %v855 = vld [vmem:[#allocation5 + $0x48] sm:$0xff]
    %v856 = vld [vmem:[#allocation5 + $0x50] sm:$0xf]
    %v857 = vld [vmem:[#allocation5 + $0x54] sm:$0xff]
    %v858 = vld [vmem:[#allocation5 + $0x5c] sm:$0xf]
    %v859 = vld [vmem:[#allocation5 + $0x60] sm:$0xff]
    %v860 = vld [vmem:[#allocation5 + $0x68] sm:$0xf]
    %v861 = vld [vmem:[#allocation5 + $0x6c] sm:$0xff]
    %v862 = vld [vmem:[#allocation5 + $0x74] sm:$0xf]
    %v863 = vld [vmem:[#allocation5 + $0x78] sm:$0xff]
    %v864 = vld [vmem:[#allocation5 + $0x80] sm:$0xf]
    %v865 = vld [vmem:[#allocation5 + $0x84] sm:$0xff]
    %v866 = vld [vmem:[#allocation5 + $0x8c] sm:$0xf]
    %v867 = vld [vmem:[#allocation5 + $0x90] sm:$0xff]
    %v868 = vld [vmem:[#allocation5 + $0x98] sm:$0xf]
    %v869 = vld [vmem:[#allocation5 + $0x9c] sm:$0xff]
    %v870 = vld [vmem:[#allocation5 + $0xa4] sm:$0xf]
    %v871 = vld [vmem:[#allocation5 + $0xa8] sm:$0xff]
    %v872 = vld [vmem:[#allocation5 + $0xb0] sm:$0xf]
    %v873 = vld [vmem:[#allocation5 + $0xb4] sm:$0xff]
    %v874 = vld [vmem:[#allocation5 + $0xbc] sm:$0xf]
    %v875 = vld [vmem:[%s5] sm:$0x7]
    %v877 = vlaneseq
    %v878 = vshrl.u32 %v877, 7
    %v879 = vsub.s32 0, %v878
    %v880 = vrot.slane %v875, %v879
    %v881 = vlaneseq
    %v882 = vshrl.u32 %v881, 7
    %v883 = vsub.s32 1, %v882
    %v884 = vrot.slane %v875, %v883
    %v885 = vlaneseq
    %v886 = vshrl.u32 %v885, 7
    %v887 = vsub.s32 2, %v886
    %v888 = vrot.slane %v875, %v887
    %v924 = vunpack.c.l.b16 %v843
    %v925 = vunpack.c.h.b16 %v843
    %v926 = vunpack.c.l.b16 %v844
    %v927 = vunpack.c.l.b16 %v845
    %v928 = vunpack.c.h.b16 %v845
    %v929 = vunpack.c.l.b16 %v846
    %v930 = vunpack.c.l.b16 %v847
    %v931 = vunpack.c.h.b16 %v847
    %v932 = vunpack.c.l.b16 %v848
    %v933 = vunpack.c.l.b16 %v849
    %v934 = vunpack.c.h.b16 %v849
    %v935 = vunpack.c.l.b16 %v850
    %v936 = vunpack.c.l.b16 %v851
    %v937 = vunpack.c.h.b16 %v851
    %v938 = vunpack.c.l.b16 %v852
    %v939 = vunpack.c.l.b16 %v853
    %v940 = vunpack.c.h.b16 %v853
    %v941 = vunpack.c.l.b16 %v854
    %v942 = vunpack.c.l.b16 %v855
    %v943 = vunpack.c.h.b16 %v855
    %v944 = vunpack.c.l.b16 %v856
    %v945 = vunpack.c.l.b16 %v857
    %v946 = vunpack.c.h.b16 %v857
    %v947 = vunpack.c.l.b16 %v858
    %v948 = vunpack.c.l.b16 %v859
    %v949 = vunpack.c.h.b16 %v859
    %v950 = vunpack.c.l.b16 %v860
    %v951 = vunpack.c.l.b16 %v861
    %v952 = vunpack.c.h.b16 %v861
    %v953 = vunpack.c.l.b16 %v862
    %v954 = vunpack.c.l.b16 %v863
    %v955 = vunpack.c.h.b16 %v863
    %v956 = vunpack.c.l.b16 %v864
    %v957 = vunpack.c.l.b16 %v865
    %v958 = vunpack.c.h.b16 %v865
    %v959 = vunpack.c.l.b16 %v866
    %v960 = vunpack.c.l.b16 %v867
    %v961 = vunpack.c.h.b16 %v867
    %v962 = vunpack.c.l.b16 %v868
    %v963 = vunpack.c.l.b16 %v869
    %v964 = vunpack.c.h.b16 %v869
    %v965 = vunpack.c.l.b16 %v870
    %v966 = vunpack.c.l.b16 %v871
    %v967 = vunpack.c.h.b16 %v871
    %v968 = vunpack.c.l.b16 %v872
    %v969 = vunpack.c.l.b16 %v873
    %v970 = vunpack.c.h.b16 %v873
    %v971 = vunpack.c.l.b16 %v874
    %v972 = vpack.c.b16 %v927, %v924
    %v973 = vpack.c.b16 %v928, %v925
    %v974 = vpack.c.b16 %v929, %v926
    %v975 = vpack.c.b16 %v933, %v930
    %v976 = vpack.c.b16 %v934, %v931
    %v977 = vpack.c.b16 %v935, %v932
    %v978 = vpack.c.b16 %v939, %v936
    %v979 = vpack.c.b16 %v940, %v937
    %v980 = vpack.c.b16 %v941, %v938
    %v981 = vpack.c.b16 %v945, %v942
    %v982 = vpack.c.b16 %v946, %v943
    %v983 = vpack.c.b16 %v947, %v944
    %v984 = vpack.c.b16 %v951, %v948
    %v985 = vpack.c.b16 %v952, %v949
    %v986 = vpack.c.b16 %v953, %v950
    %v987 = vpack.c.b16 %v957, %v954
    %v988 = vpack.c.b16 %v958, %v955
    %v989 = vpack.c.b16 %v959, %v956
    %v990 = vpack.c.b16 %v963, %v960
    %v991 = vpack.c.b16 %v964, %v961
    %v992 = vpack.c.b16 %v965, %v962
    %v993 = vpack.c.b16 %v969, %v966
    %v994 = vpack.c.b16 %v970, %v967
    %v995 = vpack.c.b16 %v971, %v968
    %1020 = vmatprep.subr.bf16.mxu0 %v973
    %1021 = vmatpush1.bf16.msra.mxu0 %v972
    %1022 = vmatprep.subr.bf16.mxu0 %v976
    %1023 = vmatpush1.bf16.msra.mxu0 %v975
    %1024 = vmatprep.subr.bf16.mxu0 %v979
    %1025 = vmatpush1.bf16.msra.mxu0 %v978
    %1026 = vmatprep.subr.bf16.mxu0 %v982
    %1027 = vmatpush1.bf16.msra.mxu0 %v981
    %1028 = vmatprep.subr.bf16.mxu0 %v985
    %1029 = vmatpush1.bf16.msra.mxu0 %v984
    %1030 = vmatprep.subr.bf16.mxu0 %v988
    %1031 = vmatpush1.bf16.msra.mxu0 %v987
    %1032 = vmatprep.subr.bf16.mxu0 %v991
    %1033 = vmatpush1.bf16.msra.mxu0 %v990
    %1034 = vmatprep.subr.bf16.mxu0 %v994
    %1035 = vmatpush1.bf16.msra.mxu0 %v993
    %1036 = vmatprep.subr.bf16.mxu0 0
    %1037 = vmatpush1.bf16.msra.mxu0 0
    %1038 = vmatprep.subr.bf16.mxu0 0
    %1039 = vmatpush1.bf16.msra.mxu0 0
    %1040 = vmatprep.subr.bf16.mxu0 0
    %1041 = vmatpush1.bf16.msra.mxu0 0
    %1042 = vmatprep.subr.bf16.mxu0 0
    %1043 = vmatpush1.bf16.msra.mxu0 0
    %1044 = vmatprep.subr.bf16.mxu0 0
    %1045 = vmatpush1.bf16.msra.mxu0 0
    %1046 = vmatprep.subr.bf16.mxu0 0
    %1047 = vmatpush1.bf16.msra.mxu0 0
    %1048 = vmatprep.subr.bf16.mxu0 0
    %1049 = vmatpush1.bf16.msra.mxu0 0
    %1050 = vmatprep.subr.bf16.mxu0 0
    %1051 = vmatpush1.bf16.msra.mxu0 0
    %1052 = vmatprep.mubr.bf16.mxu0 0
    %1053 = vmatmul.mubr.bf16.gmra.mrb[0].mxu0 %v710
    %v1054 = vpop.f32.mrb[0].mxu0
    %v1055 = vadd.f32 %v880, %v1054
    %v1056 = vpop.f32.mrb[0].mxu0
    %v1057 = vadd.f32 %v884, %v1056
    %v1058 = vpop.f32.mrb[0].mxu0
    %v1059 = vpop.f32.mrb[0].mxu0
    %1060 = vdwg.mxu0
    %1061 = vmatprep.subr.bf16.mxu0 0
    %1062 = vmatpush1.bf16.msra.mxu0 %v974
    %1063 = vmatprep.subr.bf16.mxu0 0
    %1064 = vmatpush1.bf16.msra.mxu0 %v977
    %1065 = vmatprep.subr.bf16.mxu0 0
    %1066 = vmatpush1.bf16.msra.mxu0 %v980
    %1067 = vmatprep.subr.bf16.mxu0 0
    %1068 = vmatpush1.bf16.msra.mxu0 %v983
    %1069 = vmatprep.subr.bf16.mxu0 0
    %1070 = vmatpush1.bf16.msra.mxu0 %v986
    %1071 = vmatprep.subr.bf16.mxu0 0
    %1072 = vmatpush1.bf16.msra.mxu0 %v989
    %1073 = vmatprep.subr.bf16.mxu0 0
    %1074 = vmatpush1.bf16.msra.mxu0 %v992
    %1075 = vmatprep.subr.bf16.mxu0 0
    %1076 = vmatpush1.bf16.msra.mxu0 %v995
    %1077 = vmatprep.subr.bf16.mxu0 0
    %1078 = vmatpush1.bf16.msra.mxu0 0
    %1079 = vmatprep.subr.bf16.mxu0 0
    %1080 = vmatpush1.bf16.msra.mxu0 0
    %1081 = vmatprep.subr.bf16.mxu0 0
    %1082 = vmatpush1.bf16.msra.mxu0 0
    %1083 = vmatprep.subr.bf16.mxu0 0
    %1084 = vmatpush1.bf16.msra.mxu0 0
    %1085 = vmatprep.subr.bf16.mxu0 0
    %1086 = vmatpush1.bf16.msra.mxu0 0
    %1087 = vmatprep.subr.bf16.mxu0 0
    %1088 = vmatpush1.bf16.msra.mxu0 0
    %1089 = vmatprep.subr.bf16.mxu0 0
    %1090 = vmatpush1.bf16.msra.mxu0 0
    %1091 = vmatprep.subr.bf16.mxu0 0
    %1092 = vmatpush1.bf16.msra.mxu0 0
    %1093 = vmatprep.mubr.bf16.mxu0 0
    %1094 = vmatmul.mubr.bf16.gmra.mrb[0].mxu0 %v710
    %v1095 = vpop.f32.mrb[0].mxu0
    %v1096 = vadd.f32 %v888, %v1095
    %v1097 = vpop.f32.mrb[0].mxu0
    %v1098 = vpop.f32.mrb[0].mxu0
    %v1099 = vpop.f32.mrb[0].mxu0
    %1100 = vdwg.mxu0
    %v1101 = vadd.f32 %v840, %v1055
    %v1102 = vxor.u32 %v1101, 2147483648
    %v1103 = vmul.f32 %v1102, 1.442695
    %v1104 = vpow.pop %v1103
    %v1105 = vadd.f32 %v1104, 1.0
    %v1106 = vrcp.pop %v1105
    %v1107 = vmul.f32 1.0, %v1106
    %v1108 = vadd.f32 %v841, %v1057
    %v1109 = vxor.u32 %v1108, 2147483648
    %v1110 = vmul.f32 %v1109, 1.442695
    %v1111 = vpow.pop %v1110
    %v1112 = vadd.f32 %v1111, 1.0
    %v1113 = vrcp.pop %v1112
    %v1114 = vmul.f32 1.0, %v1113
    %v1115 = vmul.f32 %v1107, %v1096
    %v1116 = vadd.f32 %v842, %v1115
    %v1117 = vtanh.pop %v1116
    %v1118 = vsub.f32 1.0, %v1114
    %v1119 = vmul.f32 %v1118, %v1117
    %v1120 = vmul.f32 %v1114, %v709
    %v1121 = vadd.f32 %v1119, %v1120
    %v1122 = vld [vmem:[%s402] sm:$0xff]
    %v1123 = vld [vmem:[%s402 + $0x8] sm:$0xff]
    %v1124 = vld [vmem:[%s402 + $0x10] sm:$0xff]
    %v1125 = vpack.c.bf16 %v1121, %v1121
    %1126 = vmatprep.subr.bf16.mxu0 %v973
    %1127 = vmatpush1.bf16.msra.mxu0 %v972
    %1128 = vmatprep.subr.bf16.mxu0 %v976
    %1129 = vmatpush1.bf16.msra.mxu0 %v975
    %1130 = vmatprep.subr.bf16.mxu0 %v979
    %1131 = vmatpush1.bf16.msra.mxu0 %v978
    %1132 = vmatprep.subr.bf16.mxu0 %v982
    %1133 = vmatpush1.bf16.msra.mxu0 %v981
    %1134 = vmatprep.subr.bf16.mxu0 %v985
    %1135 = vmatpush1.bf16.msra.mxu0 %v984
    %1136 = vmatprep.subr.bf16.mxu0 %v988
    %1137 = vmatpush1.bf16.msra.mxu0 %v987
    %1138 = vmatprep.subr.bf16.mxu0 %v991
    %1139 = vmatpush1.bf16.msra.mxu0 %v990
    %1140 = vmatprep.subr.bf16.mxu0 %v994
    %1141 = vmatpush1.bf16.msra.mxu0 %v993
    %1142 = vmatprep.subr.bf16.mxu0 0
    %1143 = vmatpush1.bf16.msra.mxu0 0
    %1144 = vmatprep.subr.bf16.mxu0 0
    %1145 = vmatpush1.bf16.msra.mxu0 0
    %1146 = vmatprep.subr.bf16.mxu0 0
    %1147 = vmatpush1.bf16.msra.mxu0 0
    %1148 = vmatprep.subr.bf16.mxu0 0
    %1149 = vmatpush1.bf16.msra.mxu0 0
    %1150 = vmatprep.subr.bf16.mxu0 0
    %1151 = vmatpush1.bf16.msra.mxu0 0
    %1152 = vmatprep.subr.bf16.mxu0 0
    %1153 = vmatpush1.bf16.msra.mxu0 0
    %1154 = vmatprep.subr.bf16.mxu0 0
    %1155 = vmatpush1.bf16.msra.mxu0 0
    %1156 = vmatprep.subr.bf16.mxu0 0
    %1157 = vmatpush1.bf16.msra.mxu0 0
    %1158 = vmatprep.mubr.bf16.mxu0 0
    %1159 = vmatmul.mubr.bf16.gmra.mrb[0].mxu0 %v1125
    %v1160 = vpop.f32.mrb[0].mxu0
    %v1161 = vadd.f32 %v880, %v1160
    %v1162 = vpop.f32.mrb[0].mxu0
    %v1163 = vadd.f32 %v884, %v1162
    %v1164 = vpop.f32.mrb[0].mxu0
    %v1165 = vpop.f32.mrb[0].mxu0
    %1166 = vdwg.mxu0
    %1167 = vmatprep.subr.bf16.mxu0 0
    %1168 = vmatpush1.bf16.msra.mxu0 %v974
    %1169 = vmatprep.subr.bf16.mxu0 0
    %1170 = vmatpush1.bf16.msra.mxu0 %v977
    %1171 = vmatprep.subr.bf16.mxu0 0
    %1172 = vmatpush1.bf16.msra.mxu0 %v980
    %1173 = vmatprep.subr.bf16.mxu0 0
    %1174 = vmatpush1.bf16.msra.mxu0 %v983
    %1175 = vmatprep.subr.bf16.mxu0 0
    %1176 = vmatpush1.bf16.msra.mxu0 %v986
    %1177 = vmatprep.subr.bf16.mxu0 0
    %1178 = vmatpush1.bf16.msra.mxu0 %v989
    %1179 = vmatprep.subr.bf16.mxu0 0
    %1180 = vmatpush1.bf16.msra.mxu0 %v992
    %1181 = vmatprep.subr.bf16.mxu0 0
    %1182 = vmatpush1.bf16.msra.mxu0 %v995
    %1183 = vmatprep.subr.bf16.mxu0 0
    %1184 = vmatpush1.bf16.msra.mxu0 0
    %1185 = vmatprep.subr.bf16.mxu0 0
    %1186 = vmatpush1.bf16.msra.mxu0 0
    %1187 = vmatprep.subr.bf16.mxu0 0
    %1188 = vmatpush1.bf16.msra.mxu0 0
    %1189 = vmatprep.subr.bf16.mxu0 0
    %1190 = vmatpush1.bf16.msra.mxu0 0
    %1191 = vmatprep.subr.bf16.mxu0 0
    %1192 = vmatpush1.bf16.msra.mxu0 0
    %1193 = vmatprep.subr.bf16.mxu0 0
    %1194 = vmatpush1.bf16.msra.mxu0 0
    %1195 = vmatprep.subr.bf16.mxu0 0
    %1196 = vmatpush1.bf16.msra.mxu0 0
    %1197 = vmatprep.subr.bf16.mxu0 0
    %1198 = vmatpush1.bf16.msra.mxu0 0
    %1199 = vmatprep.mubr.bf16.mxu0 0
    %1200 = vmatmul.mubr.bf16.gmra.mrb[0].mxu0 %v1125
    %v1201 = vpop.f32.mrb[0].mxu0
    %v1202 = vadd.f32 %v888, %v1201
    %v1203 = vpop.f32.mrb[0].mxu0
    %v1204 = vpop.f32.mrb[0].mxu0
    %v1205 = vpop.f32.mrb[0].mxu0
    %1206 = vdwg.mxu0
    %v1207 = vadd.f32 %v1122, %v1161
    %v1208 = vxor.u32 %v1207, 2147483648
    %v1209 = vmul.f32 %v1208, 1.442695
    %v1210 = vpow.pop %v1209
    %v1211 = vadd.f32 %v1210, 1.0
    %v1212 = vrcp.pop %v1211
    %v1213 = vmul.f32 1.0, %v1212
    %v1214 = vadd.f32 %v1123, %v1163
    %v1215 = vxor.u32 %v1214, 2147483648
    %v1216 = vmul.f32 %v1215, 1.442695
    %v1217 = vpow.pop %v1216
    %v1218 = vadd.f32 %v1217, 1.0
    %v1219 = vrcp.pop %v1218
    %v1220 = vmul.f32 1.0, %v1219
    %v1221 = vmul.f32 %v1213, %v1202
    %v1222 = vadd.f32 %v1124, %v1221
    %v1223 = vtanh.pop %v1222
    %v1224 = vsub.f32 1.0, %v1220
    %v1225 = vmul.f32 %v1224, %v1223
    %v1226 = vmul.f32 %v1220, %v1121
    %v1227 = vadd.f32 %v1225, %v1226
    %v1228 = vld [vmem:[%s406] sm:$0xff]
    %v1229 = vld [vmem:[%s406 + $0x8] sm:$0xff]
    %v1230 = vld [vmem:[%s406 + $0x10] sm:$0xff]
    %v1231 = vpack.c.bf16 %v1227, %v1227
    %1232 = vmatprep.subr.bf16.mxu0 %v973
    %1233 = vmatpush1.bf16.msra.mxu0 %v972
    %1234 = vmatprep.subr.bf16.mxu0 %v976
    %1235 = vmatpush1.bf16.msra.mxu0 %v975
    %1236 = vmatprep.subr.bf16.mxu0 %v979
    %1237 = vmatpush1.bf16.msra.mxu0 %v978
    %1238 = vmatprep.subr.bf16.mxu0 %v982
    %1239 = vmatpush1.bf16.msra.mxu0 %v981
    %1240 = vmatprep.subr.bf16.mxu0 %v985
    %1241 = vmatpush1.bf16.msra.mxu0 %v984
    %1242 = vmatprep.subr.bf16.mxu0 %v988
    %1243 = vmatpush1.bf16.msra.mxu0 %v987
    %1244 = vmatprep.subr.bf16.mxu0 %v991
    %1245 = vmatpush1.bf16.msra.mxu0 %v990
    %1246 = vmatprep.subr.bf16.mxu0 %v994
    %1247 = vmatpush1.bf16.msra.mxu0 %v993
    %1248 = vmatprep.subr.bf16.mxu0 0
    %1249 = vmatpush1.bf16.msra.mxu0 0
    %1250 = vmatprep.subr.bf16.mxu0 0
    %1251 = vmatpush1.bf16.msra.mxu0 0
    %1252 = vmatprep.subr.bf16.mxu0 0
    %1253 = vmatpush1.bf16.msra.mxu0 0
    %1254 = vmatprep.subr.bf16.mxu0 0
    %1255 = vmatpush1.bf16.msra.mxu0 0
    %1256 = vmatprep.subr.bf16.mxu0 0
    %1257 = vmatpush1.bf16.msra.mxu0 0
    %1258 = vmatprep.subr.bf16.mxu0 0
    %1259 = vmatpush1.bf16.msra.mxu0 0
    %1260 = vmatprep.subr.bf16.mxu0 0
    %1261 = vmatpush1.bf16.msra.mxu0 0
    %1262 = vmatprep.subr.bf16.mxu0 0
    %1263 = vmatpush1.bf16.msra.mxu0 0
    %1264 = vmatprep.mubr.bf16.mxu0 0
    %1265 = vmatmul.mubr.bf16.gmra.mrb[0].mxu0 %v1231
    %v1266 = vpop.f32.mrb[0].mxu0
    %v1267 = vadd.f32 %v880, %v1266
    %v1268 = vpop.f32.mrb[0].mxu0
    %v1269 = vadd.f32 %v884, %v1268
    %v1270 = vpop.f32.mrb[0].mxu0
    %v1271 = vpop.f32.mrb[0].mxu0
    %1272 = vdwg.mxu0
    %1273 = vmatprep.subr.bf16.mxu0 0
    %1274 = vmatpush1.bf16.msra.mxu0 %v974
    %1275 = vmatprep.subr.bf16.mxu0 0
    %1276 = vmatpush1.bf16.msra.mxu0 %v977
    %1277 = vmatprep.subr.bf16.mxu0 0
    %1278 = vmatpush1.bf16.msra.mxu0 %v980
    %1279 = vmatprep.subr.bf16.mxu0 0
    %1280 = vmatpush1.bf16.msra.mxu0 %v983
    %1281 = vmatprep.subr.bf16.mxu0 0
    %1282 = vmatpush1.bf16.msra.mxu0 %v986
    %1283 = vmatprep.subr.bf16.mxu0 0
    %1284 = vmatpush1.bf16.msra.mxu0 %v989
    %1285 = vmatprep.subr.bf16.mxu0 0
    %1286 = vmatpush1.bf16.msra.mxu0 %v992
    %1287 = vmatprep.subr.bf16.mxu0 0
    %1288 = vmatpush1.bf16.msra.mxu0 %v995
    %1289 = vmatprep.subr.bf16.mxu0 0
    %1290 = vmatpush1.bf16.msra.mxu0 0
    %1291 = vmatprep.subr.bf16.mxu0 0
    %1292 = vmatpush1.bf16.msra.mxu0 0
    %1293 = vmatprep.subr.bf16.mxu0 0
    %1294 = vmatpush1.bf16.msra.mxu0 0
    %1295 = vmatprep.subr.bf16.mxu0 0
    %1296 = vmatpush1.bf16.msra.mxu0 0
    %1297 = vmatprep.subr.bf16.mxu0 0
    %1298 = vmatpush1.bf16.msra.mxu0 0
    %1299 = vmatprep.subr.bf16.mxu0 0
    %1300 = vmatpush1.bf16.msra.mxu0 0
    %1301 = vmatprep.subr.bf16.mxu0 0
    %1302 = vmatpush1.bf16.msra.mxu0 0
    %1303 = vmatprep.subr.bf16.mxu0 0
    %1304 = vmatpush1.bf16.msra.mxu0 0
    %1305 = vmatprep.mubr.bf16.mxu0 0
    %1306 = vmatmul.mubr.bf16.gmra.mrb[0].mxu0 %v1231
    %v1307 = vpop.f32.mrb[0].mxu0
    %v1308 = vadd.f32 %v888, %v1307
    %v1309 = vpop.f32.mrb[0].mxu0
    %v1310 = vpop.f32.mrb[0].mxu0
    %v1311 = vpop.f32.mrb[0].mxu0
    %1312 = vdwg.mxu0
    %v1313 = vadd.f32 %v1228, %v1267
    %v1314 = vxor.u32 %v1313, 2147483648
    %v1315 = vmul.f32 %v1314, 1.442695
    %v1316 = vpow.pop %v1315
    %v1317 = vadd.f32 %v1316, 1.0
    %v1318 = vrcp.pop %v1317
    %v1319 = vmul.f32 1.0, %v1318
    %v1320 = vadd.f32 %v1229, %v1269
    %v1321 = vxor.u32 %v1320, 2147483648
    %v1322 = vmul.f32 %v1321, 1.442695
    %v1323 = vpow.pop %v1322
    %v1324 = vadd.f32 %v1323, 1.0
    %v1325 = vrcp.pop %v1324
    %v1326 = vmul.f32 1.0, %v1325
    %v1327 = vmul.f32 %v1319, %v1308
    %v1328 = vadd.f32 %v1230, %v1327
    %v1329 = vtanh.pop %v1328
    %v1330 = vsub.f32 1.0, %v1326
    %v1331 = vmul.f32 %v1330, %v1329
    %v1332 = vmul.f32 %v1326, %v1227
    %v1333 = vadd.f32 %v1331, %v1332
    %v1334 = vld [vmem:[%s410] sm:$0xff]
    %v1335 = vld [vmem:[%s410 + $0x8] sm:$0xff]
    %v1336 = vld [vmem:[%s410 + $0x10] sm:$0xff]
    %v1337 = vpack.c.bf16 %v1333, %v1333
    %1338 = vmatprep.subr.bf16.mxu0 %v973
    %1339 = vmatpush1.bf16.msra.mxu0 %v972
    %1340 = vmatprep.subr.bf16.mxu0 %v976
    %1341 = vmatpush1.bf16.msra.mxu0 %v975
    %1342 = vmatprep.subr.bf16.mxu0 %v979
    %1343 = vmatpush1.bf16.msra.mxu0 %v978
    %1344 = vmatprep.subr.bf16.mxu0 %v982
    %1345 = vmatpush1.bf16.msra.mxu0 %v981
    %1346 = vmatprep.subr.bf16.mxu0 %v985
    %1347 = vmatpush1.bf16.msra.mxu0 %v984
    %1348 = vmatprep.subr.bf16.mxu0 %v988
    %1349 = vmatpush1.bf16.msra.mxu0 %v987
    %1350 = vmatprep.subr.bf16.mxu0 %v991
    %1351 = vmatpush1.bf16.msra.mxu0 %v990
    %1352 = vmatprep.subr.bf16.mxu0 %v994
    %1353 = vmatpush1.bf16.msra.mxu0 %v993
    %1354 = vmatprep.subr.bf16.mxu0 0
    %1355 = vmatpush1.bf16.msra.mxu0 0
    %1356 = vmatprep.subr.bf16.mxu0 0
    %1357 = vmatpush1.bf16.msra.mxu0 0
    %1358 = vmatprep.subr.bf16.mxu0 0
    %1359 = vmatpush1.bf16.msra.mxu0 0
    %1360 = vmatprep.subr.bf16.mxu0 0
    %1361 = vmatpush1.bf16.msra.mxu0 0
    %1362 = vmatprep.subr.bf16.mxu0 0
    %1363 = vmatpush1.bf16.msra.mxu0 0
    %1364 = vmatprep.subr.bf16.mxu0 0
    %1365 = vmatpush1.bf16.msra.mxu0 0
    %1366 = vmatprep.subr.bf16.mxu0 0
    %1367 = vmatpush1.bf16.msra.mxu0 0
    %1368 = vmatprep.subr.bf16.mxu0 0
    %1369 = vmatpush1.bf16.msra.mxu0 0
    %1370 = vmatprep.mubr.bf16.mxu0 0
    %1371 = vmatmul.mubr.bf16.gmra.mrb[0].mxu0 %v1337
    %v1372 = vpop.f32.mrb[0].mxu0
    %v1373 = vadd.f32 %v880, %v1372
    %v1374 = vpop.f32.mrb[0].mxu0
    %v1375 = vadd.f32 %v884, %v1374
    %v1376 = vpop.f32.mrb[0].mxu0
    %v1377 = vpop.f32.mrb[0].mxu0
    %1378 = vdwg.mxu0
    %1379 = vmatprep.subr.bf16.mxu0 0
    %1380 = vmatpush1.bf16.msra.mxu0 %v974
    %1381 = vmatprep.subr.bf16.mxu0 0
    %1382 = vmatpush1.bf16.msra.mxu0 %v977
    %1383 = vmatprep.subr.bf16.mxu0 0
    %1384 = vmatpush1.bf16.msra.mxu0 %v980
    %1385 = vmatprep.subr.bf16.mxu0 0
    %1386 = vmatpush1.bf16.msra.mxu0 %v983
    %1387 = vmatprep.subr.bf16.mxu0 0
    %1388 = vmatpush1.bf16.msra.mxu0 %v986
    %1389 = vmatprep.subr.bf16.mxu0 0
    %1390 = vmatpush1.bf16.msra.mxu0 %v989
    %1391 = vmatprep.subr.bf16.mxu0 0
    %1392 = vmatpush1.bf16.msra.mxu0 %v992
    %1393 = vmatprep.subr.bf16.mxu0 0
    %1394 = vmatpush1.bf16.msra.mxu0 %v995
    %1395 = vmatprep.subr.bf16.mxu0 0
    %1396 = vmatpush1.bf16.msra.mxu0 0
    %1397 = vmatprep.subr.bf16.mxu0 0
    %1398 = vmatpush1.bf16.msra.mxu0 0
    %1399 = vmatprep.subr.bf16.mxu0 0
    %1400 = vmatpush1.bf16.msra.mxu0 0
    %1401 = vmatprep.subr.bf16.mxu0 0
    %1402 = vmatpush1.bf16.msra.mxu0 0
    %1403 = vmatprep.subr.bf16.mxu0 0
    %1404 = vmatpush1.bf16.msra.mxu0 0
    %1405 = vmatprep.subr.bf16.mxu0 0
    %1406 = vmatpush1.bf16.msra.mxu0 0
    %1407 = vmatprep.subr.bf16.mxu0 0
    %1408 = vmatpush1.bf16.msra.mxu0 0
    %1409 = vmatprep.subr.bf16.mxu0 0
    %1410 = vmatpush1.bf16.msra.mxu0 0
    %1411 = vmatprep.mubr.bf16.mxu0 0
    %1412 = vmatmul.mubr.bf16.gmra.mrb[0].mxu0 %v1337
    %v1413 = vpop.f32.mrb[0].mxu0
    %v1414 = vadd.f32 %v888, %v1413
    %v1415 = vpop.f32.mrb[0].mxu0
    %v1416 = vpop.f32.mrb[0].mxu0
    %v1417 = vpop.f32.mrb[0].mxu0
    %1418 = vdwg.mxu0
    %v1419 = vadd.f32 %v1334, %v1373
    %v1420 = vxor.u32 %v1419, 2147483648
    %v1421 = vmul.f32 %v1420, 1.442695
    %v1422 = vpow.pop %v1421
    %v1423 = vadd.f32 %v1422, 1.0
    %v1424 = vrcp.pop %v1423
    %v1425 = vmul.f32 1.0, %v1424
    %v1426 = vadd.f32 %v1335, %v1375
    %v1427 = vxor.u32 %v1426, 2147483648
    %v1428 = vmul.f32 %v1427, 1.442695
    %v1429 = vpow.pop %v1428
    %v1430 = vadd.f32 %v1429, 1.0
    %v1431 = vrcp.pop %v1430
    %v1432 = vmul.f32 1.0, %v1431
    %v1433 = vmul.f32 %v1425, %v1414
    %v1434 = vadd.f32 %v1336, %v1433
    %v1435 = vtanh.pop %v1434
    %v1436 = vsub.f32 1.0, %v1432
    %v1437 = vmul.f32 %v1436, %v1435
    %v1438 = vmul.f32 %v1432, %v1333
    %v1439 = vadd.f32 %v1437, %v1438
    %v1440 = vld [vmem:[%s414] sm:$0xff]
    %v1441 = vld [vmem:[%s414 + $0x8] sm:$0xff]
    %v1442 = vld [vmem:[%s414 + $0x10] sm:$0xff]
    %v1443 = vpack.c.bf16 %v1439, %v1439
    %1444 = vmatprep.subr.bf16.mxu0 %v973
    %1445 = vmatpush1.bf16.msra.mxu0 %v972
    %1446 = vmatprep.subr.bf16.mxu0 %v976
    %1447 = vmatpush1.bf16.msra.mxu0 %v975
    %1448 = vmatprep.subr.bf16.mxu0 %v979
    %1449 = vmatpush1.bf16.msra.mxu0 %v978
    %1450 = vmatprep.subr.bf16.mxu0 %v982
    %1451 = vmatpush1.bf16.msra.mxu0 %v981
    %1452 = vmatprep.subr.bf16.mxu0 %v985
    %1453 = vmatpush1.bf16.msra.mxu0 %v984
    %1454 = vmatprep.subr.bf16.mxu0 %v988
    %1455 = vmatpush1.bf16.msra.mxu0 %v987
    %1456 = vmatprep.subr.bf16.mxu0 %v991
    %1457 = vmatpush1.bf16.msra.mxu0 %v990
    %1458 = vmatprep.subr.bf16.mxu0 %v994
    %1459 = vmatpush1.bf16.msra.mxu0 %v993
    %1460 = vmatprep.subr.bf16.mxu0 0
    %1461 = vmatpush1.bf16.msra.mxu0 0
    %1462 = vmatprep.subr.bf16.mxu0 0
    %1463 = vmatpush1.bf16.msra.mxu0 0
    %1464 = vmatprep.subr.bf16.mxu0 0
    %1465 = vmatpush1.bf16.msra.mxu0 0
    %1466 = vmatprep.subr.bf16.mxu0 0
    %1467 = vmatpush1.bf16.msra.mxu0 0
    %1468 = vmatprep.subr.bf16.mxu0 0
    %1469 = vmatpush1.bf16.msra.mxu0 0
    %1470 = vmatprep.subr.bf16.mxu0 0
    %1471 = vmatpush1.bf16.msra.mxu0 0
    %1472 = vmatprep.subr.bf16.mxu0 0
    %1473 = vmatpush1.bf16.msra.mxu0 0
    %1474 = vmatprep.subr.bf16.mxu0 0
    %1475 = vmatpush1.bf16.msra.mxu0 0
    %1476 = vmatprep.mubr.bf16.mxu0 0
    %1477 = vmatmul.mubr.bf16.gmra.mrb[0].mxu0 %v1443
    %v1478 = vpop.f32.mrb[0].mxu0
    %v1479 = vadd.f32 %v880, %v1478
    %v1480 = vpop.f32.mrb[0].mxu0
    %v1481 = vadd.f32 %v884, %v1480
    %v1482 = vpop.f32.mrb[0].mxu0
    %v1483 = vpop.f32.mrb[0].mxu0
    %1484 = vdwg.mxu0
    %1485 = vmatprep.subr.bf16.mxu0 0
    %1486 = vmatpush1.bf16.msra.mxu0 %v974
    %1487 = vmatprep.subr.bf16.mxu0 0
    %1488 = vmatpush1.bf16.msra.mxu0 %v977
    %1489 = vmatprep.subr.bf16.mxu0 0
    %1490 = vmatpush1.bf16.msra.mxu0 %v980
    %1491 = vmatprep.subr.bf16.mxu0 0
    %1492 = vmatpush1.bf16.msra.mxu0 %v983
    %1493 = vmatprep.subr.bf16.mxu0 0
    %1494 = vmatpush1.bf16.msra.mxu0 %v986
    %1495 = vmatprep.subr.bf16.mxu0 0
    %1496 = vmatpush1.bf16.msra.mxu0 %v989
    %1497 = vmatprep.subr.bf16.mxu0 0
    %1498 = vmatpush1.bf16.msra.mxu0 %v992
    %1499 = vmatprep.subr.bf16.mxu0 0
    %1500 = vmatpush1.bf16.msra.mxu0 %v995
    %1501 = vmatprep.subr.bf16.mxu0 0
    %1502 = vmatpush1.bf16.msra.mxu0 0
    %1503 = vmatprep.subr.bf16.mxu0 0
    %1504 = vmatpush1.bf16.msra.mxu0 0
    %1505 = vmatprep.subr.bf16.mxu0 0
    %1506 = vmatpush1.bf16.msra.mxu0 0
    %1507 = vmatprep.subr.bf16.mxu0 0
    %1508 = vmatpush1.bf16.msra.mxu0 0
    %1509 = vmatprep.subr.bf16.mxu0 0
    %1510 = vmatpush1.bf16.msra.mxu0 0
    %1511 = vmatprep.subr.bf16.mxu0 0
    %1512 = vmatpush1.bf16.msra.mxu0 0
    %1513 = vmatprep.subr.bf16.mxu0 0
    %1514 = vmatpush1.bf16.msra.mxu0 0
    %1515 = vmatprep.subr.bf16.mxu0 0
    %1516 = vmatpush1.bf16.msra.mxu0 0
    %1517 = vmatprep.mubr.bf16.mxu0 0
    %1518 = vmatmul.mubr.bf16.gmra.mrb[0].mxu0 %v1443
    %v1519 = vpop.f32.mrb[0].mxu0
    %v1520 = vadd.f32 %v888, %v1519
    %v1521 = vpop.f32.mrb[0].mxu0
    %v1522 = vpop.f32.mrb[0].mxu0
    %v1523 = vpop.f32.mrb[0].mxu0
    %1524 = vdwg.mxu0
    %v1525 = vadd.f32 %v1440, %v1479
    %v1526 = vxor.u32 %v1525, 2147483648
    %v1527 = vmul.f32 %v1526, 1.442695
    %v1528 = vpow.pop %v1527
    %v1529 = vadd.f32 %v1528, 1.0
    %v1530 = vrcp.pop %v1529
    %v1531 = vmul.f32 1.0, %v1530
    %v1532 = vadd.f32 %v1441, %v1481
    %v1533 = vxor.u32 %v1532, 2147483648
    %v1534 = vmul.f32 %v1533, 1.442695
    %v1535 = vpow.pop %v1534
    %v1536 = vadd.f32 %v1535, 1.0
    %v1537 = vrcp.pop %v1536
    %v1538 = vmul.f32 1.0, %v1537
    %v1539 = vmul.f32 %v1531, %v1520
    %v1540 = vadd.f32 %v1442, %v1539
    %v1541 = vtanh.pop %v1540
    %v1542 = vsub.f32 1.0, %v1538
    %v1543 = vmul.f32 %v1542, %v1541
    %v1544 = vmul.f32 %v1538, %v1439
    %v1545 = vadd.f32 %v1543, %v1544
    %v1546 = vld [vmem:[%s418] sm:$0xff]
    %v1547 = vld [vmem:[%s418 + $0x8] sm:$0xff]
    %v1548 = vld [vmem:[%s418 + $0x10] sm:$0xff]
    %v1549 = vpack.c.bf16 %v1545, %v1545
    %1550 = vmatprep.subr.bf16.mxu0 %v973
    %1551 = vmatpush1.bf16.msra.mxu0 %v972
    %1552 = vmatprep.subr.bf16.mxu0 %v976
    %1553 = vmatpush1.bf16.msra.mxu0 %v975
    %1554 = vmatprep.subr.bf16.mxu0 %v979
    %1555 = vmatpush1.bf16.msra.mxu0 %v978
    %1556 = vmatprep.subr.bf16.mxu0 %v982
    %1557 = vmatpush1.bf16.msra.mxu0 %v981
    %1558 = vmatprep.subr.bf16.mxu0 %v985
    %1559 = vmatpush1.bf16.msra.mxu0 %v984
    %1560 = vmatprep.subr.bf16.mxu0 %v988
    %1561 = vmatpush1.bf16.msra.mxu0 %v987
    %1562 = vmatprep.subr.bf16.mxu0 %v991
    %1563 = vmatpush1.bf16.msra.mxu0 %v990
    %1564 = vmatprep.subr.bf16.mxu0 %v994
    %1565 = vmatpush1.bf16.msra.mxu0 %v993
    %1566 = vmatprep.subr.bf16.mxu0 0
    %1567 = vmatpush1.bf16.msra.mxu0 0
    %1568 = vmatprep.subr.bf16.mxu0 0
    %1569 = vmatpush1.bf16.msra.mxu0 0
    %1570 = vmatprep.subr.bf16.mxu0 0
    %1571 = vmatpush1.bf16.msra.mxu0 0
    %1572 = vmatprep.subr.bf16.mxu0 0
    %1573 = vmatpush1.bf16.msra.mxu0 0
    %1574 = vmatprep.subr.bf16.mxu0 0
    %1575 = vmatpush1.bf16.msra.mxu0 0
    %1576 = vmatprep.subr.bf16.mxu0 0
    %1577 = vmatpush1.bf16.msra.mxu0 0
    %1578 = vmatprep.subr.bf16.mxu0 0
    %1579 = vmatpush1.bf16.msra.mxu0 0
    %1580 = vmatprep.subr.bf16.mxu0 0
    %1581 = vmatpush1.bf16.msra.mxu0 0
    %1582 = vmatprep.mubr.bf16.mxu0 0
    %1583 = vmatmul.mubr.bf16.gmra.mrb[0].mxu0 %v1549
    %v1584 = vpop.f32.mrb[0].mxu0
    %v1585 = vadd.f32 %v880, %v1584
    %v1586 = vpop.f32.mrb[0].mxu0
    %v1587 = vadd.f32 %v884, %v1586
    %v1588 = vpop.f32.mrb[0].mxu0
    %v1589 = vpop.f32.mrb[0].mxu0
    %1590 = vdwg.mxu0
    %1591 = vmatprep.subr.bf16.mxu0 0
    %1592 = vmatpush1.bf16.msra.mxu0 %v974
    %1593 = vmatprep.subr.bf16.mxu0 0
    %1594 = vmatpush1.bf16.msra.mxu0 %v977
    %1595 = vmatprep.subr.bf16.mxu0 0
    %1596 = vmatpush1.bf16.msra.mxu0 %v980
    %1597 = vmatprep.subr.bf16.mxu0 0
    %1598 = vmatpush1.bf16.msra.mxu0 %v983
    %1599 = vmatprep.subr.bf16.mxu0 0
    %1600 = vmatpush1.bf16.msra.mxu0 %v986
    %1601 = vmatprep.subr.bf16.mxu0 0
    %1602 = vmatpush1.bf16.msra.mxu0 %v989
    %1603 = vmatprep.subr.bf16.mxu0 0
    %1604 = vmatpush1.bf16.msra.mxu0 %v992
    %1605 = vmatprep.subr.bf16.mxu0 0
    %1606 = vmatpush1.bf16.msra.mxu0 %v995
    %1607 = vmatprep.subr.bf16.mxu0 0
    %1608 = vmatpush1.bf16.msra.mxu0 0
    %1609 = vmatprep.subr.bf16.mxu0 0
    %1610 = vmatpush1.bf16.msra.mxu0 0
    %1611 = vmatprep.subr.bf16.mxu0 0
    %1612 = vmatpush1.bf16.msra.mxu0 0
    %1613 = vmatprep.subr.bf16.mxu0 0
    %1614 = vmatpush1.bf16.msra.mxu0 0
    %1615 = vmatprep.subr.bf16.mxu0 0
    %1616 = vmatpush1.bf16.msra.mxu0 0
    %1617 = vmatprep.subr.bf16.mxu0 0
    %1618 = vmatpush1.bf16.msra.mxu0 0
    %1619 = vmatprep.subr.bf16.mxu0 0
    %1620 = vmatpush1.bf16.msra.mxu0 0
    %1621 = vmatprep.subr.bf16.mxu0 0
    %1622 = vmatpush1.bf16.msra.mxu0 0
    %1623 = vmatprep.mubr.bf16.mxu0 0
    %1624 = vmatmul.mubr.bf16.gmra.mrb[0].mxu0 %v1549
    %v1625 = vpop.f32.mrb[0].mxu0
    %v1626 = vadd.f32 %v888, %v1625
    %v1627 = vpop.f32.mrb[0].mxu0
    %v1628 = vpop.f32.mrb[0].mxu0
    %v1629 = vpop.f32.mrb[0].mxu0
    %1630 = vdwg.mxu0
    %v1631 = vadd.f32 %v1546, %v1585
    %v1632 = vxor.u32 %v1631, 2147483648
    %v1633 = vmul.f32 %v1632, 1.442695
    %v1634 = vpow.pop %v1633
    %v1635 = vadd.f32 %v1634, 1.0
    %v1636 = vrcp.pop %v1635
    %v1637 = vmul.f32 1.0, %v1636
    %v1638 = vadd.f32 %v1547, %v1587
    %v1639 = vxor.u32 %v1638, 2147483648
    %v1640 = vmul.f32 %v1639, 1.442695
    %v1641 = vpow.pop %v1640
    %v1642 = vadd.f32 %v1641, 1.0
    %v1643 = vrcp.pop %v1642
    %v1644 = vmul.f32 1.0, %v1643
    %v1645 = vmul.f32 %v1637, %v1626
    %v1646 = vadd.f32 %v1548, %v1645
    %v1647 = vtanh.pop %v1646
    %v1648 = vsub.f32 1.0, %v1644
    %v1649 = vmul.f32 %v1648, %v1647
    %v1650 = vmul.f32 %v1644, %v1545
    %v1651 = vadd.f32 %v1649, %v1650
    %v1652 = vld [vmem:[%s422] sm:$0xff]
    %v1653 = vld [vmem:[%s422 + $0x8] sm:$0xff]
    %v1654 = vld [vmem:[%s422 + $0x10] sm:$0xff]
    %v1655 = vpack.c.bf16 %v1651, %v1651
    %1656 = vmatprep.subr.bf16.mxu0 %v973
    %1657 = vmatpush1.bf16.msra.mxu0 %v972
    %1658 = vmatprep.subr.bf16.mxu0 %v976
    %1659 = vmatpush1.bf16.msra.mxu0 %v975
    %1660 = vmatprep.subr.bf16.mxu0 %v979
    %1661 = vmatpush1.bf16.msra.mxu0 %v978
    %1662 = vmatprep.subr.bf16.mxu0 %v982
    %1663 = vmatpush1.bf16.msra.mxu0 %v981
    %1664 = vmatprep.subr.bf16.mxu0 %v985
    %1665 = vmatpush1.bf16.msra.mxu0 %v984
    %1666 = vmatprep.subr.bf16.mxu0 %v988
    %1667 = vmatpush1.bf16.msra.mxu0 %v987
    %1668 = vmatprep.subr.bf16.mxu0 %v991
    %1669 = vmatpush1.bf16.msra.mxu0 %v990
    %1670 = vmatprep.subr.bf16.mxu0 %v994
    %1671 = vmatpush1.bf16.msra.mxu0 %v993
    %1672 = vmatprep.subr.bf16.mxu0 0
    %1673 = vmatpush1.bf16.msra.mxu0 0
    %1674 = vmatprep.subr.bf16.mxu0 0
    %1675 = vmatpush1.bf16.msra.mxu0 0
    %1676 = vmatprep.subr.bf16.mxu0 0
    %1677 = vmatpush1.bf16.msra.mxu0 0
    %1678 = vmatprep.subr.bf16.mxu0 0
    %1679 = vmatpush1.bf16.msra.mxu0 0
    %1680 = vmatprep.subr.bf16.mxu0 0
    %1681 = vmatpush1.bf16.msra.mxu0 0
    %1682 = vmatprep.subr.bf16.mxu0 0
    %1683 = vmatpush1.bf16.msra.mxu0 0
    %1684 = vmatprep.subr.bf16.mxu0 0
    %1685 = vmatpush1.bf16.msra.mxu0 0
    %1686 = vmatprep.subr.bf16.mxu0 0
    %1687 = vmatpush1.bf16.msra.mxu0 0
    %1688 = vmatprep.mubr.bf16.mxu0 0
    %1689 = vmatmul.mubr.bf16.gmra.mrb[0].mxu0 %v1655
    %v1690 = vpop.f32.mrb[0].mxu0
    %v1691 = vadd.f32 %v880, %v1690
    %v1692 = vpop.f32.mrb[0].mxu0
    %v1693 = vadd.f32 %v884, %v1692
    %v1694 = vpop.f32.mrb[0].mxu0
    %v1695 = vpop.f32.mrb[0].mxu0
    %1696 = vdwg.mxu0
    %1697 = vmatprep.subr.bf16.mxu0 0
    %1698 = vmatpush1.bf16.msra.mxu0 %v974
    %1699 = vmatprep.subr.bf16.mxu0 0
    %1700 = vmatpush1.bf16.msra.mxu0 %v977
    %1701 = vmatprep.subr.bf16.mxu0 0
    %1702 = vmatpush1.bf16.msra.mxu0 %v980
    %1703 = vmatprep.subr.bf16.mxu0 0
    %1704 = vmatpush1.bf16.msra.mxu0 %v983
    %1705 = vmatprep.subr.bf16.mxu0 0
    %1706 = vmatpush1.bf16.msra.mxu0 %v986
    %1707 = vmatprep.subr.bf16.mxu0 0
    %1708 = vmatpush1.bf16.msra.mxu0 %v989
    %1709 = vmatprep.subr.bf16.mxu0 0
    %1710 = vmatpush1.bf16.msra.mxu0 %v992
    %1711 = vmatprep.subr.bf16.mxu0 0
    %1712 = vmatpush1.bf16.msra.mxu0 %v995
    %1713 = vmatprep.subr.bf16.mxu0 0
    %1714 = vmatpush1.bf16.msra.mxu0 0
    %1715 = vmatprep.subr.bf16.mxu0 0
    %1716 = vmatpush1.bf16.msra.mxu0 0
    %1717 = vmatprep.subr.bf16.mxu0 0
    %1718 = vmatpush1.bf16.msra.mxu0 0
    %1719 = vmatprep.subr.bf16.mxu0 0
    %1720 = vmatpush1.bf16.msra.mxu0 0
    %1721 = vmatprep.subr.bf16.mxu0 0
    %1722 = vmatpush1.bf16.msra.mxu0 0
    %1723 = vmatprep.subr.bf16.mxu0 0
    %1724 = vmatpush1.bf16.msra.mxu0 0
    %1725 = vmatprep.subr.bf16.mxu0 0
    %1726 = vmatpush1.bf16.msra.mxu0 0
    %1727 = vmatprep.subr.bf16.mxu0 0
    %1728 = vmatpush1.bf16.msra.mxu0 0
    %1729 = vmatprep.mubr.bf16.mxu0 0
    %1730 = vmatmul.mubr.bf16.gmra.mrb[0].mxu0 %v1655
    %v1731 = vpop.f32.mrb[0].mxu0
    %v1732 = vadd.f32 %v888, %v1731
    %v1733 = vpop.f32.mrb[0].mxu0
    %v1734 = vpop.f32.mrb[0].mxu0
    %v1735 = vpop.f32.mrb[0].mxu0
    %1736 = vdwg.mxu0
    %v1737 = vadd.f32 %v1652, %v1691
    %v1738 = vxor.u32 %v1737, 2147483648
    %v1739 = vmul.f32 %v1738, 1.442695
    %v1740 = vpow.pop %v1739
    %v1741 = vadd.f32 %v1740, 1.0
    %v1742 = vrcp.pop %v1741
    %v1743 = vmul.f32 1.0, %v1742
    %v1744 = vadd.f32 %v1653, %v1693
    %v1745 = vxor.u32 %v1744, 2147483648
    %v1746 = vmul.f32 %v1745, 1.442695
    %v1747 = vpow.pop %v1746
    %v1748 = vadd.f32 %v1747, 1.0
    %v1749 = vrcp.pop %v1748
    %v1750 = vmul.f32 1.0, %v1749
    %v1751 = vmul.f32 %v1743, %v1732
    %v1752 = vadd.f32 %v1654, %v1751
    %v1753 = vtanh.pop %v1752
    %v1754 = vsub.f32 1.0, %v1750
    %v1755 = vmul.f32 %v1754, %v1753
    %v1756 = vmul.f32 %v1750, %v1651
    %v1757 = vadd.f32 %v1755, %v1756
    %1758 = vst [vmem:[%s9] sm:$0xff] %v1757
    // Predicated region
    $region42: #{decoder_rnn_forward.1} parent=1 // pred_check
      _
    $region43: #{decoder_rnn_forward.1} parent=1 // pred_check_branch
      %1760 = sbr.rel (0) target = $region45
    $region44: #{decoder_rnn_forward.1} parent=1 // pred_region
      _
    $region45: #{decoder_rnn_forward.1} parent=1 // pred_fallthru
      _
    // Predicated region
    $region46: #{decoder_rnn_forward.1} parent=1 // pred_check
      _
    $region47: #{decoder_rnn_forward.1} parent=1 // pred_check_branch
      %1762 = sbr.rel (0) target = $region49
    $region48: #{decoder_rnn_forward.1} parent=1 // pred_region
      _
    $region49: #{decoder_rnn_forward.1} parent=1 // pred_fallthru
      _
    // Predicated region
    $region50: #{decoder_rnn_forward.1} parent=1 // pred_check
      _
    $region51: #{decoder_rnn_forward.1} parent=1 // pred_check_branch
      %1764 = sbr.rel (0) target = $region53
    $region52: #{decoder_rnn_forward.1} parent=1 // pred_region
      _
    $region53: #{decoder_rnn_forward.1} parent=1 // pred_fallthru
      _
    // Predicated region
    $region54: #{decoder_rnn_forward.1} parent=1 // pred_check
      _
    $region55: #{decoder_rnn_forward.1} parent=1 // pred_check_branch
      %1766 = sbr.rel (0) target = $region57
    $region56: #{decoder_rnn_forward.1} parent=1 // pred_region
      _
    $region57: #{decoder_rnn_forward.1} parent=1 // pred_fallthru
      _
    %1767 = vsyncpa [#allocation4], 1
    %1768 = vsyncpa [#allocation6], 1

</llo_original>
